<compile_context>
chip_gen: v6e
topology: v6e:2x2x1
jax: 0.10.0
libtpu: 0.0.40
codegen_flags: <defaults>
</compile_context>

<pallas_src>
import math

import jax
import jax.numpy as jnp
import numpy as np
from jax import lax
from jax.experimental import pallas as pl
from jax.experimental.pallas import tpu as pltpu


# ----------------------------------------------------------------------------
# Pallas kernel: one grid step == one post-norm TransformerEncoderLayer.
# ----------------------------------------------------------------------------
def _make_encoder_kernel(num_layers, d_model, batch, seq):
    bw = batch * seq
    scale = 1.0 / math.sqrt(float(d_model))   # PyTorch: head_dim**-0.5, nhead=1
    last_row = (seq - 1) * batch              # rows of the final time step

    def layer_norm(x, g, b):
        mean = jnp.mean(x, axis=-1, keepdims=True)
        c = x - mean
        var = jnp.mean(c * c, axis=-1, keepdims=True)
        return c * lax.rsqrt(var + 1e-5) * g + b

    def kernel(x0_ref, live_ref, pe_ref, w_ref, vec_ref, out_ref, act_ref):
        l = pl.program_id(0)

        # Fused pre-encoder glue: live-mask multiply + positional encoding.
        # TODO(synk): dropout (p=0.1) after PE / inside the encoder layers is
        # identity in eval mode and therefore omitted.
        @pl.when(l == 0)
        def _():
            act_ref[...] = x0_ref[...] * live_ref[...] + pe_ref[...]

        x = act_ref[...]                                   # (bw, d) f32

        w_all = w_ref[0]                                   # (6, d, d) bf16
        wq = w_all[0]
        wk = w_all[1]
        wv = w_all[2]
        wo = w_all[3]
        w1 = w_all[4]
        w2 = w_all[5]
        vec = vec_ref[0]                                   # (10, d) f32
        bq, bk, bv, bo = vec[0:1], vec[1:2], vec[2:3], vec[3:4]
        g1, be1 = vec[4:5], vec[5:6]
        b1, b2 = vec[6:7], vec[7:8]
        g2, be2 = vec[8:9], vec[9:10]

        # ---- single-head self-attention as flat 2-D matmuls + block mask ---
        xb = x.astype(jnp.bfloat16)
        q = jnp.dot(xb, wq, preferred_element_type=jnp.float32) + bq
        k = jnp.dot(xb, wk, preferred_element_type=jnp.float32) + bk
        v = jnp.dot(xb, wv, preferred_element_type=jnp.float32) + bv

        # flat index i = t*batch + b: positions attend only within their own
        # batch column (matches per-sequence attention; like the original
        # module, no key-padding mask is applied for dead timesteps).
        row = lax.broadcasted_iota(jnp.int32, (bw, bw), 0)
        col = lax.broadcasted_iota(jnp.int32, (bw, bw), 1)
        bias = jnp.where((row % batch) == (col % batch), 0.0, -1e30)

        s = lax.dot_general(q, k, (((1,), (1,)), ((), ())),
                            preferred_element_type=jnp.float32) * scale + bias
        s = s - jnp.max(s, axis=-1, keepdims=True)
        e = jnp.exp(s)
        p = e * pl.reciprocal(jnp.sum(e, axis=-1, keepdims=True), approx=True)
        ctx = jnp.dot(p, v, preferred_element_type=jnp.float32)       # (bw, d)

        attn = jnp.dot(ctx.astype(jnp.bfloat16), wo,
                       preferred_element_type=jnp.float32) + bo
        x = layer_norm(x + attn, g1, be1)                  # post-norm

        # ---- feed-forward (ReLU), dim_ff == d_model -------------------------
        h = jnp.maximum(
            jnp.dot(x.astype(jnp.bfloat16), w1,
                    preferred_element_type=jnp.float32) + b1, 0.0)
        f = jnp.dot(h.astype(jnp.bfloat16), w2,
                    preferred_element_type=jnp.float32) + b2
        x = layer_norm(x + f, g2, be2)

        act_ref[...] = x

        # state_final = encoder_output[-1, :, :]
        @pl.when(l == num_layers - 1)
        def _():
            out_ref[...] = x[last_row:, :]

    return kernel


def transformer_encoder_pallas(x0, live, pe, w_stack, vec_stack, *,
                               d_model, num_layers, batch, seq):
    """x0/live/pe: time-major flattened (W*B, d) / (W*B, 1) / (W*B, d) f32.
    w_stack: (L, 6, d, d) bf16  [wq, wk, wv, wo, w1, w2] (right-multiply form).
    vec_stack: (L, 10, d) f32   [bq, bk, bv, bo, g1, be1, b1, b2, g2, be2]."""
    bw = batch * seq
    kernel = _make_encoder_kernel(num_layers, d_model, batch, seq)
    return pl.pallas_call(
        kernel,
        out_shape=jax.ShapeDtypeStruct((batch, d_model), jnp.float32),
        grid_spec=pltpu.PrefetchScalarGridSpec(
            num_scalar_prefetch=0,
            grid=(num_layers,),
            in_specs=[
                pl.BlockSpec((bw, d_model), lambda l: (0, 0)),
                pl.BlockSpec((bw, 1), lambda l: (0, 0)),
                pl.BlockSpec((bw, d_model), lambda l: (0, 0)),
                pl.BlockSpec((1, 6, d_model, d_model), lambda l: (l, 0, 0, 0)),
                pl.BlockSpec((1, 10, d_model), lambda l: (l, 0, 0)),
            ],
            out_specs=pl.BlockSpec((batch, d_model), lambda l: (0, 0)),
            scratch_shapes=[pltpu.VMEM((bw, d_model), jnp.float32)],
        ),
        compiler_params=pltpu.CompilerParams(
            dimension_semantics=("arbitrary",)),
    )(x0, live, pe, w_stack, vec_stack)


# ----------------------------------------------------------------------------
# Parameter packing: PyTorch layout -> transposed, UNPADDED, layer-stacked.
# Weight matrices are stored bf16; biases / LayerNorm params stay f32.
# ----------------------------------------------------------------------------
def pack_layer_params(layers):
    d = layers[0]['norm1_weight'].shape[0]
    w_list, v_list = [], []
    for p in layers:
        assert p['linear1_weight'].shape == (d, d)   # dim_ff == d_model here
        wq = p['in_proj_weight'][0 * d:1 * d].T
        wk = p['in_proj_weight'][1 * d:2 * d].T
        wv = p['in_proj_weight'][2 * d:3 * d].T
        w_list.append(jnp.stack(
            [wq, wk, wv, p['out_proj_weight'].T,
             p['linear1_weight'].T, p['linear2_weight'].T]).astype(jnp.bfloat16))
        v_list.append(jnp.stack(
            [p['in_proj_bias'][0 * d:1 * d],
             p['in_proj_bias'][1 * d:2 * d],
             p['in_proj_bias'][2 * d:3 * d],
             p['out_proj_bias'],
             p['norm1_weight'], p['norm1_bias'],
             p['linear1_bias'], p['linear2_bias'],
             p['norm2_weight'], p['norm2_bias']]).astype(jnp.float32))
    return jnp.stack(w_list), jnp.stack(v_list)


# ----------------------------------------------------------------------------
# JAX glue reproducing the module's pre-encoder processing + jitted forward.
# ----------------------------------------------------------------------------
def positional_encoding(max_len, d_model):
    position = jnp.arange(max_len, dtype=jnp.float32)[:, None]
    div_term = jnp.exp(jnp.arange(0, d_model, 2, dtype=jnp.float32)
                       * (-math.log(10000.0) / d_model))
    pe = jnp.zeros((max_len, d_model), jnp.float32)
    pe = pe.at[:, 0::2].set(jnp.sin(position * div_term))
    pe = pe.at[:, 1::2].set(jnp.cos(position * div_term)[:, :d_model // 2])
    return pe


def make_forward(emb_table, w_stack, vec_stack, *, num_item, d_model,
                 num_layers, window_size, r_min, r_max):
    pe = positional_encoding(window_size, d_model)   # constant per checkpoint

    @jax.jit
    def forward(items_tm, rew_tm, live_mat):
        """items_tm: (W, B) int32 (-1 allowed); rew_tm: (W, B); live_mat: (W, B) bool."""
        W, B = items_tm.shape
        # get_embedding('action'): X[X == -1] = num_item, then embedding lookup.
        # TODO(synk): data-dependent embedding gather stays in XLA glue (tiny,
        # no clean BlockSpec expression).
        items = jnp.where(items_tm == -1, num_item, items_tm)
        e_i = jnp.take(emb_table, items, axis=0)               # (W, B, dim_item)
        # feedback column is a dense pass-through -> reward, then normalized.
        normed_r = jnp.minimum(
            (rew_tm.astype(jnp.float32) - r_min) / (r_max - r_min), 1.0)
        # reward_handle == 'cat': d_model = dim_item + 1
        state_flat = jnp.concatenate([e_i, normed_r[..., None]], axis=-1)
        x0 = state_flat.reshape(W * B, d_model)                # time-major flat
        live = live_mat.astype(jnp.float32).reshape(W * B, 1)
        pe_flat = jnp.broadcast_to(pe[:W, None, :],
                                   (W, B, d_model)).reshape(W * B, d_model)
        return transformer_encoder_pallas(
            x0, live, pe_flat, w_stack, vec_stack,
            d_model=d_model, num_layers=num_layers, batch=B, seq=W)

    return forward


# ----------------------------------------------------------------------------
# Pure-JAX reference (mirrors nn.TransformerEncoder, post-norm, eval mode).
# ----------------------------------------------------------------------------
def _ln_ref(x, g, b, eps=1e-5):
    m = jnp.mean(x, axis=-1, keepdims=True)
    v = jnp.mean((x - m) ** 2, axis=-1, keepdims=True)
    return (x - m) / jnp.sqrt(v + eps) * g + b


def transformer_encoder_reference(x_tm, layers, d_model):
    x = x_tm                                                   # (W, B, D)
    scale = 1.0 / math.sqrt(d_model)
    for p in layers:
        qkv = x @ p['in_proj_weight'].T + p['in_proj_bias']
        q, k, v = jnp.split(qkv, 3, axis=-1)
        s = jnp.einsum('ibd,jbd->bij', q, k) * scale
        a = jax.nn.softmax(s, axis=-1)
        ctx = jnp.einsum('bij,jbd->ibd', a, v)
        attn = ctx @ p['out_proj_weight'].T + p['out_proj_bias']
        x = _ln_ref(x + attn, p['norm1_weight'], p['norm1_bias'])
        h = jax.nn.relu(x @ p['linear1_weight'].T + p['linear1_bias'])
        f = h @ p['linear2_weight'].T + p['linear2_bias']
        x = _ln_ref(x + f, p['norm2_weight'], p['norm2_bias'])
    return x[-1]                                               # (B, D)


if __name__ == "__main__":
    B, W = 4, 8                 # batch, window_size
    dim_item = 32
    d_model = dim_item + 1      # reward_handle='cat' appends normalized reward
    num_layers = 2              # num_att_layers
    num_item = 50
    r_min, r_max = 0.0, 5.0     # train_min / train_max

    key = jax.random.PRNGKey(0)
    keys = jax.random.split(key, 8)

    # item embedding table (num_item real items + 1 "missing" embedding)
    emb_table = 0.01 * jax.random.normal(keys[0], (num_item + 1, dim_item),
                                         jnp.float32)

    def make_layer(k):
        ks = jax.random.split(k, 12)
        u = lambda kk, shape, b=0.2: jax.random.uniform(kk, shape, jnp.float32,
                                                        -b, b)
        return {
            'in_proj_weight': u(ks[0], (3 * d_model, d_model)),
            'in_proj_bias': u(ks[1], (3 * d_model,)),
            'out_proj_weight': u(ks[2], (d_model, d_model)),
            'out_proj_bias': u(ks[3], (d_model,)),
            'norm1_weight': 1.0 + u(ks[4], (d_model,), 0.05),
            'norm1_bias': u(ks[5], (d_model,), 0.05),
            'linear1_weight': u(ks[6], (d_model, d_model)),   # dim_ff == d_model
            'linear1_bias': u(ks[7], (d_model,)),
            'linear2_weight': u(ks[8], (d_model, d_model)),
            'linear2_bias': u(ks[9], (d_model,)),
            'norm2_weight': 1.0 + u(ks[10], (d_model,), 0.05),
            'norm2_bias': u(ks[11], (d_model,), 0.05),
        }

    layers = [make_layer(keys[1]), make_layer(keys[2])]
    # packed once per checkpoint (outside the per-call trace)
    w_stack, vec_stack = pack_layer_params(layers)

    # synthetic window of (item id, reward, live flag) per sample, time-major
    items_tm = jax.random.randint(keys[3], (W, B), 0, num_item, jnp.int32)
    items_tm = items_tm.at[0, 1].set(-1).at[5, 2].set(-1)     # "missing" items
    rew_tm = jax.random.uniform(keys[4], (W, B), jnp.float32, 0.0, 5.0)
    lengths = jnp.array([8, 3, 5, 1], dtype=jnp.int32)
    live_mat = jnp.arange(W)[:, None] < lengths[None, :]      # (W, B) bool

    forward = make_forward(emb_table, w_stack, vec_stack, num_item=num_item,
                           d_model=d_model, num_layers=num_layers,
                           window_size=W, r_min=r_min, r_max=r_max)
    out = jax.block_until_ready(forward(items_tm, rew_tm, live_mat))
    assert out.shape == (B, d_model)

    # ---- verify against a pure-JAX reference of the same forward ----------
    # The kernel stores the weight matrices in bf16 (perf review), so the
    # reference uses the identically-quantized (bf16 -> f32) weights; the
    # remaining divergence is bf16 rounding of the dot activations and the
    # approx softmax reciprocal, covered by the 2e-2 tolerance.
    def quantize(p):
        q = dict(p)
        for name in ('in_proj_weight', 'out_proj_weight',
                     'linear1_weight', 'linear2_weight'):
            q[name] = p[name].astype(jnp.bfloat16).astype(jnp.float32)
        return q
    layers_q = [quantize(p) for p in layers]

    items_c = jnp.where(items_tm == -1, num_item, items_tm)
    e_i = jnp.take(emb_table, items_c, axis=0)
    normed_r = jnp.minimum((rew_tm[..., None] - r_min) / (r_max - r_min), 1.0)
    state_flat = jnp.concatenate([e_i, normed_r], axis=-1)
    state_masked = state_flat * live_mat.astype(jnp.float32)[..., None]
    state_pe = state_masked + positional_encoding(W, d_model)[:, None, :]
    ref = transformer_encoder_reference(state_pe, layers_q, d_model)

    np.testing.assert_allclose(np.asarray(out), np.asarray(ref),
                               rtol=2e-2, atol=2e-2)
    print("KERNEL_OK")
</pallas_src>

<mosaic_0001>
module attributes {stable_mosaic.version = 11 : i64} {
  func.func @kernel(%arg0: i32, %arg1: memref<32x33xf32, #tpu.memory_space<vmem>>, %arg2: memref<32x1xf32, #tpu.memory_space<vmem>>, %arg3: memref<32x33xf32, #tpu.memory_space<vmem>>, %arg4: memref<1x6x33x33xbf16, #tpu.memory_space<vmem>>, %arg5: memref<1x10x33xf32, #tpu.memory_space<vmem>>, %arg6: memref<4x33xf32, #tpu.memory_space<vmem>>, %arg7: memref<32x33xf32, #tpu.memory_space<vmem>>) attributes {dimension_semantics = [#tpu.dimension_semantics<arbitrary>], iteration_bounds = array<i64: 2>, scalar_prefetch = 0 : i64, scratch_operands = 1 : i64, tpu.core_type = #tpu.core_type<tc>, window_params = [{pipeline_mode = #tpu.pipeline_mode<synchronous>, transform_indices = @transform_0, window_bounds = array<i64: 32, 33>}, {pipeline_mode = #tpu.pipeline_mode<synchronous>, transform_indices = @transform_1, window_bounds = array<i64: 32, 1>}, {pipeline_mode = #tpu.pipeline_mode<synchronous>, transform_indices = @transform_2, window_bounds = array<i64: 32, 33>}, {transform_indices = @transform_3, window_bounds = array<i64: 1, 6, 33, 33>}, {transform_indices = @transform_4, window_bounds = array<i64: 1, 10, 33>}, {pipeline_mode = #tpu.pipeline_mode<synchronous>, transform_indices = @transform_5, window_bounds = array<i64: 4, 33>}]} {
    %c0_i32 = arith.constant 0 : i32
    %0 = arith.cmpi eq, %arg0, %c0_i32 : i32
    %1 = arith.extui %0 : i1 to i32
    %c0_i32_0 = arith.constant 0 : i32
    %2 = arith.cmpi ne, %1, %c0_i32_0 : i32
    scf.if %2 {
      %c0_46 = arith.constant 0 : index
      %c0_47 = arith.constant 0 : index
      %153 = vector.load %arg1[%c0_46, %c0_47] : memref<32x33xf32, #tpu.memory_space<vmem>>, vector<32x33xf32>
      %c0_48 = arith.constant 0 : index
      %c0_49 = arith.constant 0 : index
      %154 = vector.load %arg2[%c0_48, %c0_49] : memref<32x1xf32, #tpu.memory_space<vmem>>, vector<32x1xf32>
      %155 = vector.broadcast %154 : vector<32x1xf32> to vector<32x33xf32>
      %156 = arith.mulf %153, %155 : vector<32x33xf32>
      %c0_50 = arith.constant 0 : index
      %c0_51 = arith.constant 0 : index
      %157 = vector.load %arg3[%c0_50, %c0_51] : memref<32x33xf32, #tpu.memory_space<vmem>>, vector<32x33xf32>
      %158 = arith.addf %156, %157 : vector<32x33xf32>
      %c0_52 = arith.constant 0 : index
      %c0_53 = arith.constant 0 : index
      %159 = vector.load %arg7[%c0_52, %c0_53] : memref<32x33xf32, #tpu.memory_space<vmem>>, vector<32x33xf32>
      tpu.vector_store %arg7[%c0_52, %c0_53], %158 {strides = array<i32>} : memref<32x33xf32, #tpu.memory_space<vmem>>, vector<32x33xf32>,
    } else {
    }
    %c0 = arith.constant 0 : index
    %c0_1 = arith.constant 0 : index
    %3 = vector.load %arg7[%c0, %c0_1] : memref<32x33xf32, #tpu.memory_space<vmem>>, vector<32x33xf32>
    %c0_2 = arith.constant 0 : index
    %c0_3 = arith.constant 0 : index
    %c0_4 = arith.constant 0 : index
    %c0_5 = arith.constant 0 : index
    %4 = vector.load %arg4[%c0_2, %c0_3, %c0_4, %c0_5] : memref<1x6x33x33xbf16, #tpu.memory_space<vmem>>, vector<1x6x33x33xbf16>
    %5 = vector.shape_cast %4 : vector<1x6x33x33xbf16> to vector<6x33x33xbf16>
    %6 = vector.extract_strided_slice %5 {offsets = [0, 0, 0], sizes = [1, 33, 33], strides = [1, 1, 1]} : vector<6x33x33xbf16> to vector<1x33x33xbf16>
    %7 = vector.shape_cast %6 : vector<1x33x33xbf16> to vector<33x33xbf16>
    %8 = vector.extract_strided_slice %5 {offsets = [1, 0, 0], sizes = [1, 33, 33], strides = [1, 1, 1]} : vector<6x33x33xbf16> to vector<1x33x33xbf16>
    %9 = vector.shape_cast %8 : vector<1x33x33xbf16> to vector<33x33xbf16>
    %10 = vector.extract_strided_slice %5 {offsets = [2, 0, 0], sizes = [1, 33, 33], strides = [1, 1, 1]} : vector<6x33x33xbf16> to vector<1x33x33xbf16>
    %11 = vector.shape_cast %10 : vector<1x33x33xbf16> to vector<33x33xbf16>
    %12 = vector.extract_strided_slice %5 {offsets = [3, 0, 0], sizes = [1, 33, 33], strides = [1, 1, 1]} : vector<6x33x33xbf16> to vector<1x33x33xbf16>
    %13 = vector.shape_cast %12 : vector<1x33x33xbf16> to vector<33x33xbf16>
    %14 = vector.extract_strided_slice %5 {offsets = [4, 0, 0], sizes = [1, 33, 33], strides = [1, 1, 1]} : vector<6x33x33xbf16> to vector<1x33x33xbf16>
    %15 = vector.shape_cast %14 : vector<1x33x33xbf16> to vector<33x33xbf16>
    %16 = vector.extract_strided_slice %5 {offsets = [5, 0, 0], sizes = [1, 33, 33], strides = [1, 1, 1]} : vector<6x33x33xbf16> to vector<1x33x33xbf16>
    %17 = vector.shape_cast %16 : vector<1x33x33xbf16> to vector<33x33xbf16>
    %c0_6 = arith.constant 0 : index
    %c0_7 = arith.constant 0 : index
    %c0_8 = arith.constant 0 : index
    %18 = vector.load %arg5[%c0_6, %c0_7, %c0_8] : memref<1x10x33xf32, #tpu.memory_space<vmem>>, vector<1x10x33xf32>
    %19 = vector.shape_cast %18 : vector<1x10x33xf32> to vector<10x33xf32>
    %20 = vector.extract_strided_slice %19 {offsets = [0, 0], sizes = [1, 33], strides = [1, 1]} : vector<10x33xf32> to vector<1x33xf32>
    %21 = vector.extract_strided_slice %19 {offsets = [1, 0], sizes = [1, 33], strides = [1, 1]} : vector<10x33xf32> to vector<1x33xf32>
    %22 = vector.extract_strided_slice %19 {offsets = [2, 0], sizes = [1, 33], strides = [1, 1]} : vector<10x33xf32> to vector<1x33xf32>
    %23 = vector.extract_strided_slice %19 {offsets = [3, 0], sizes = [1, 33], strides = [1, 1]} : vector<10x33xf32> to vector<1x33xf32>
    %24 = vector.extract_strided_slice %19 {offsets = [4, 0], sizes = [1, 33], strides = [1, 1]} : vector<10x33xf32> to vector<1x33xf32>
    %25 = vector.extract_strided_slice %19 {offsets = [5, 0], sizes = [1, 33], strides = [1, 1]} : vector<10x33xf32> to vector<1x33xf32>
    %26 = vector.extract_strided_slice %19 {offsets = [6, 0], sizes = [1, 33], strides = [1, 1]} : vector<10x33xf32> to vector<1x33xf32>
    %27 = vector.extract_strided_slice %19 {offsets = [7, 0], sizes = [1, 33], strides = [1, 1]} : vector<10x33xf32> to vector<1x33xf32>
    %28 = vector.extract_strided_slice %19 {offsets = [8, 0], sizes = [1, 33], strides = [1, 1]} : vector<10x33xf32> to vector<1x33xf32>
    %29 = vector.extract_strided_slice %19 {offsets = [9, 0], sizes = [1, 33], strides = [1, 1]} : vector<10x33xf32> to vector<1x33xf32>
    %30 = arith.truncf %3 : vector<32x33xf32> to vector<32x33xbf16>
    %cst = arith.constant dense<0.000000e+00> : vector<32x33xf32>
    %31 = tpu.matmul %30, %7, %cst {dimension_numbers = #tpu.dot_dimension_numbers<[1], [0], [0], [1], [0, 0, 1, 1], [], []>} : vector<32x33xbf16>, vector<33x33xbf16>, vector<32x33xf32> -> vector<32x33xf32>
    %32 = vector.broadcast %20 : vector<1x33xf32> to vector<32x33xf32>
    %33 = arith.addf %31, %32 : vector<32x33xf32>
    %cst_9 = arith.constant dense<0.000000e+00> : vector<32x33xf32>
    %34 = tpu.matmul %30, %9, %cst_9 {dimension_numbers = #tpu.dot_dimension_numbers<[1], [0], [0], [1], [0, 0, 1, 1], [], []>} : vector<32x33xbf16>, vector<33x33xbf16>, vector<32x33xf32> -> vector<32x33xf32>
    %35 = vector.broadcast %21 : vector<1x33xf32> to vector<32x33xf32>
    %36 = arith.addf %34, %35 : vector<32x33xf32>
    %cst_10 = arith.constant dense<0.000000e+00> : vector<32x33xf32>
    %37 = tpu.matmul %30, %11, %cst_10 {dimension_numbers = #tpu.dot_dimension_numbers<[1], [0], [0], [1], [0, 0, 1, 1], [], []>} : vector<32x33xbf16>, vector<33x33xbf16>, vector<32x33xf32> -> vector<32x33xf32>
    %38 = vector.broadcast %22 : vector<1x33xf32> to vector<32x33xf32>
    %39 = arith.addf %37, %38 : vector<32x33xf32>
    %40 = tpu.iota {dimensions = array<i32: 0>} : vector<32x32xi32>
    %41 = tpu.iota {dimensions = array<i32: 1>} : vector<32x32xi32>
    %c4_i32 = arith.constant 4 : i32
    %c0_i32_11 = arith.constant 0 : i32
    %42 = arith.cmpi eq, %c4_i32, %c0_i32_11 : i32
    %c1_i32 = arith.constant 1 : i32
    %43 = arith.select %42, %c1_i32, %c4_i32 : i32
    %44 = vector.broadcast %43 : i32 to vector<32x32xi32>
    %45 = arith.remsi %40, %44 : vector<32x32xi32>
    %c0_i32_12 = arith.constant 0 : i32
    %46 = vector.broadcast %c0_i32_12 : i32 to vector<32x32xi32>
    %47 = arith.cmpi ne, %45, %46 : vector<32x32xi32>
    %c0_i32_13 = arith.constant 0 : i32
    %48 = vector.broadcast %c0_i32_13 : i32 to vector<32x32xi32>
    %49 = arith.cmpi slt, %45, %48 : vector<32x32xi32>
    %c0_i32_14 = arith.constant 0 : i32
    %50 = arith.cmpi slt, %43, %c0_i32_14 : i32
    %51 = vector.broadcast %50 : i1 to vector<32x32xi1>
    %52 = vector.broadcast %51 : vector<32x32xi1> to vector<32x32xi1>
    %53 = arith.xori %49, %52 : vector<32x32xi1>
    %54 = arith.andi %53, %47 : vector<32x32xi1>
    %55 = vector.broadcast %43 : i32 to vector<32x32xi32>
    %56 = arith.addi %45, %55 : vector<32x32xi32>
    %57 = arith.select %54, %56, %45 : vector<32x32xi1>, vector<32x32xi32>
    %c4_i32_15 = arith.constant 4 : i32
    %c0_i32_16 = arith.constant 0 : i32
    %58 = arith.cmpi eq, %c4_i32_15, %c0_i32_16 : i32
    %c1_i32_17 = arith.constant 1 : i32
    %59 = arith.select %58, %c1_i32_17, %c4_i32_15 : i32
    %60 = vector.broadcast %59 : i32 to vector<32x32xi32>
    %61 = arith.remsi %41, %60 : vector<32x32xi32>
    %c0_i32_18 = arith.constant 0 : i32
    %62 = vector.broadcast %c0_i32_18 : i32 to vector<32x32xi32>
    %63 = arith.cmpi ne, %61, %62 : vector<32x32xi32>
    %c0_i32_19 = arith.constant 0 : i32
    %64 = vector.broadcast %c0_i32_19 : i32 to vector<32x32xi32>
    %65 = arith.cmpi slt, %61, %64 : vector<32x32xi32>
    %c0_i32_20 = arith.constant 0 : i32
    %66 = arith.cmpi slt, %59, %c0_i32_20 : i32
    %67 = vector.broadcast %66 : i1 to vector<32x32xi1>
    %68 = vector.broadcast %67 : vector<32x32xi1> to vector<32x32xi1>
    %69 = arith.xori %65, %68 : vector<32x32xi1>
    %70 = arith.andi %69, %63 : vector<32x32xi1>
    %71 = vector.broadcast %59 : i32 to vector<32x32xi32>
    %72 = arith.addi %61, %71 : vector<32x32xi32>
    %73 = arith.select %70, %72, %61 : vector<32x32xi1>, vector<32x32xi32>
    %74 = arith.cmpi eq, %57, %73 : vector<32x32xi32>
    %cst_21 = arith.constant 0.000000e+00 : f32
    %cst_22 = arith.constant -1.000000e+30 : f32
    %75 = vector.broadcast %cst_21 : f32 to vector<32x32xf32>
    %76 = vector.broadcast %cst_22 : f32 to vector<32x32xf32>
    %77 = arith.select %74, %75, %76 : vector<32x32xi1>, vector<32x32xf32>
    %cst_23 = arith.constant dense<0.000000e+00> : vector<32x32xf32>
    %78 = tpu.matmul %33, %36, %cst_23 {dimension_numbers = #tpu.dot_dimension_numbers<[1], [1], [0], [0], [0, 0, 1, 0], [], []>} : vector<32x33xf32>, vector<32x33xf32>, vector<32x32xf32> -> vector<32x32xf32>
    %cst_24 = arith.constant 0.17407766 : f32
    %79 = vector.broadcast %cst_24 : f32 to vector<32x32xf32>
    %80 = arith.mulf %78, %79 : vector<32x32xf32>
    %81 = arith.addf %80, %77 : vector<32x32xf32>
    %cst_25 = arith.constant dense<0xFF800000> : vector<32xf32>
    %82 = vector.multi_reduction <maximumf>, %81, %cst_25 [1] : vector<32x32xf32> to vector<32xf32>
    %83 = vector.shape_cast %82 : vector<32xf32> to vector<32x1xf32>
    %84 = vector.broadcast %83 : vector<32x1xf32> to vector<32x32xf32>
    %85 = arith.subf %81, %84 : vector<32x32xf32>
    %86 = math.exp %85 : vector<32x32xf32>
    %cst_26 = arith.constant dense<0.000000e+00> : vector<32xf32>
    %87 = vector.multi_reduction <add>, %86, %cst_26 [1] : vector<32x32xf32> to vector<32xf32>
    %88 = vector.shape_cast %87 : vector<32xf32> to vector<32x1xf32>
    %89 = tpu.reciprocal %88 {approx = true} : vector<32x1xf32> -> vector<32x1xf32>
    %90 = vector.broadcast %89 : vector<32x1xf32> to vector<32x32xf32>
    %91 = arith.mulf %86, %90 : vector<32x32xf32>
    %cst_27 = arith.constant dense<0.000000e+00> : vector<32x33xf32>
    %92 = tpu.matmul %91, %39, %cst_27 {dimension_numbers = #tpu.dot_dimension_numbers<[1], [0], [0], [1], [0, 0, 1, 1], [], []>} : vector<32x32xf32>, vector<32x33xf32>, vector<32x33xf32> -> vector<32x33xf32>
    %93 = arith.truncf %92 : vector<32x33xf32> to vector<32x33xbf16>
    %cst_28 = arith.constant dense<0.000000e+00> : vector<32x33xf32>
    %94 = tpu.matmul %93, %13, %cst_28 {dimension_numbers = #tpu.dot_dimension_numbers<[1], [0], [0], [1], [0, 0, 1, 1], [], []>} : vector<32x33xbf16>, vector<33x33xbf16>, vector<32x33xf32> -> vector<32x33xf32>
    %95 = vector.broadcast %23 : vector<1x33xf32> to vector<32x33xf32>
    %96 = arith.addf %94, %95 : vector<32x33xf32>
    %97 = arith.addf %3, %96 : vector<32x33xf32>
    %cst_29 = arith.constant dense<0.000000e+00> : vector<32xf32>
    %98 = vector.multi_reduction <add>, %97, %cst_29 [1] : vector<32x33xf32> to vector<32xf32>
    %99 = vector.shape_cast %98 : vector<32xf32> to vector<32x1xf32>
    %cst_30 = arith.constant 3.300000e+01 : f32
    %100 = vector.broadcast %cst_30 : f32 to vector<32x1xf32>
    %101 = arith.divf %99, %100 : vector<32x1xf32>
    %102 = vector.broadcast %101 : vector<32x1xf32> to vector<32x33xf32>
    %103 = arith.subf %97, %102 : vector<32x33xf32>
    %104 = arith.mulf %103, %103 : vector<32x33xf32>
    %cst_31 = arith.constant dense<0.000000e+00> : vector<32xf32>
    %105 = vector.multi_reduction <add>, %104, %cst_31 [1] : vector<32x33xf32> to vector<32xf32>
    %106 = vector.shape_cast %105 : vector<32xf32> to vector<32x1xf32>
    %cst_32 = arith.constant 3.300000e+01 : f32
    %107 = vector.broadcast %cst_32 : f32 to vector<32x1xf32>
    %108 = arith.divf %106, %107 : vector<32x1xf32>
    %cst_33 = arith.constant 9.99999974E-6 : f32
    %109 = vector.broadcast %cst_33 : f32 to vector<32x1xf32>
    %110 = arith.addf %108, %109 : vector<32x1xf32>
    %111 = math.rsqrt %110 : vector<32x1xf32>
    %112 = vector.broadcast %111 : vector<32x1xf32> to vector<32x33xf32>
    %113 = arith.mulf %103, %112 : vector<32x33xf32>
    %114 = vector.broadcast %24 : vector<1x33xf32> to vector<32x33xf32>
    %115 = arith.mulf %113, %114 : vector<32x33xf32>
    %116 = vector.broadcast %25 : vector<1x33xf32> to vector<32x33xf32>
    %117 = arith.addf %115, %116 : vector<32x33xf32>
    %118 = arith.truncf %117 : vector<32x33xf32> to vector<32x33xbf16>
    %cst_34 = arith.constant dense<0.000000e+00> : vector<32x33xf32>
    %119 = tpu.matmul %118, %15, %cst_34 {dimension_numbers = #tpu.dot_dimension_numbers<[1], [0], [0], [1], [0, 0, 1, 1], [], []>} : vector<32x33xbf16>, vector<33x33xbf16>, vector<32x33xf32> -> vector<32x33xf32>
    %120 = vector.broadcast %26 : vector<1x33xf32> to vector<32x33xf32>
    %121 = arith.addf %119, %120 : vector<32x33xf32>
    %cst_35 = arith.constant 0.000000e+00 : f32
    %122 = vector.broadcast %cst_35 : f32 to vector<32x33xf32>
    %123 = arith.maximumf %121, %122 : vector<32x33xf32>
    %124 = arith.truncf %123 : vector<32x33xf32> to vector<32x33xbf16>
    %cst_36 = arith.constant dense<0.000000e+00> : vector<32x33xf32>
    %125 = tpu.matmul %124, %17, %cst_36 {dimension_numbers = #tpu.dot_dimension_numbers<[1], [0], [0], [1], [0, 0, 1, 1], [], []>} : vector<32x33xbf16>, vector<33x33xbf16>, vector<32x33xf32> -> vector<32x33xf32>
    %126 = vector.broadcast %27 : vector<1x33xf32> to vector<32x33xf32>
    %127 = arith.addf %125, %126 : vector<32x33xf32>
    %128 = arith.addf %117, %127 : vector<32x33xf32>
    %cst_37 = arith.constant dense<0.000000e+00> : vector<32xf32>
    %129 = vector.multi_reduction <add>, %128, %cst_37 [1] : vector<32x33xf32> to vector<32xf32>
    %130 = vector.shape_cast %129 : vector<32xf32> to vector<32x1xf32>
    %cst_38 = arith.constant 3.300000e+01 : f32
    %131 = vector.broadcast %cst_38 : f32 to vector<32x1xf32>
    %132 = arith.divf %130, %131 : vector<32x1xf32>
    %133 = vector.broadcast %132 : vector<32x1xf32> to vector<32x33xf32>
    %134 = arith.subf %128, %133 : vector<32x33xf32>
    %135 = arith.mulf %134, %134 : vector<32x33xf32>
    %cst_39 = arith.constant dense<0.000000e+00> : vector<32xf32>
    %136 = vector.multi_reduction <add>, %135, %cst_39 [1] : vector<32x33xf32> to vector<32xf32>
    %137 = vector.shape_cast %136 : vector<32xf32> to vector<32x1xf32>
    %cst_40 = arith.constant 3.300000e+01 : f32
    %138 = vector.broadcast %cst_40 : f32 to vector<32x1xf32>
    %139 = arith.divf %137, %138 : vector<32x1xf32>
    %cst_41 = arith.constant 9.99999974E-6 : f32
    %140 = vector.broadcast %cst_41 : f32 to vector<32x1xf32>
    %141 = arith.addf %139, %140 : vector<32x1xf32>
    %142 = math.rsqrt %141 : vector<32x1xf32>
    %143 = vector.broadcast %142 : vector<32x1xf32> to vector<32x33xf32>
    %144 = arith.mulf %134, %143 : vector<32x33xf32>
    %145 = vector.broadcast %28 : vector<1x33xf32> to vector<32x33xf32>
    %146 = arith.mulf %144, %145 : vector<32x33xf32>
    %147 = vector.broadcast %29 : vector<1x33xf32> to vector<32x33xf32>
    %148 = arith.addf %146, %147 : vector<32x33xf32>
    %c0_42 = arith.constant 0 : index
    %c0_43 = arith.constant 0 : index
    %149 = vector.load %arg7[%c0_42, %c0_43] : memref<32x33xf32, #tpu.memory_space<vmem>>, vector<32x33xf32>
    tpu.vector_store %arg7[%c0_42, %c0_43], %148 {strides = array<i32>} : memref<32x33xf32, #tpu.memory_space<vmem>>, vector<32x33xf32>,
    %c1_i32_44 = arith.constant 1 : i32
    %150 = arith.cmpi eq, %arg0, %c1_i32_44 : i32
    %151 = arith.extui %150 : i1 to i32
    %c0_i32_45 = arith.constant 0 : i32
    %152 = arith.cmpi ne, %151, %c0_i32_45 : i32
    scf.if %152 {
      %153 = vector.extract_strided_slice %148 {offsets = [28, 0], sizes = [4, 33], strides = [1, 1]} : vector<32x33xf32> to vector<4x33xf32>
      %c0_46 = arith.constant 0 : index
      %c0_47 = arith.constant 0 : index
      %154 = vector.load %arg6[%c0_46, %c0_47] : memref<4x33xf32, #tpu.memory_space<vmem>>, vector<4x33xf32>
      tpu.vector_store %arg6[%c0_46, %c0_47], %153 {strides = array<i32>} : memref<4x33xf32, #tpu.memory_space<vmem>>, vector<4x33xf32>,
    } else {
    }
    return
  }
  func.func @transform_0(%arg0: i32) -> (i32, i32) {
    %c0_i32 = arith.constant 0 : i32
    %c0_i32_0 = arith.constant 0 : i32
    %c0_i32_1 = arith.constant 0 : i32
    return %c0_i32, %c0_i32_0 : i32, i32
  }
  func.func @transform_1(%arg0: i32) -> (i32, i32) {
    %c0_i32 = arith.constant 0 : i32
    %c0_i32_0 = arith.constant 0 : i32
    %c0_i32_1 = arith.constant 0 : i32
    return %c0_i32, %c0_i32_0 : i32, i32
  }
  func.func @transform_2(%arg0: i32) -> (i32, i32) {
    %c0_i32 = arith.constant 0 : i32
    %c0_i32_0 = arith.constant 0 : i32
    %c0_i32_1 = arith.constant 0 : i32
    return %c0_i32, %c0_i32_0 : i32, i32
  }
  func.func @transform_3(%arg0: i32) -> (i32, i32, i32, i32) {
    %c0_i32 = arith.constant 0 : i32
    %c0_i32_0 = arith.constant 0 : i32
    %c0_i32_1 = arith.constant 0 : i32
    %c0_i32_2 = arith.constant 0 : i32
    return %arg0, %c0_i32, %c0_i32_0, %c0_i32_1 : i32, i32, i32, i32
  }
  func.func @transform_4(%arg0: i32) -> (i32, i32, i32) {
    %c0_i32 = arith.constant 0 : i32
    %c0_i32_0 = arith.constant 0 : i32
    %c0_i32_1 = arith.constant 0 : i32
    return %arg0, %c0_i32, %c0_i32_0 : i32, i32, i32
  }
  func.func @transform_5(%arg0: i32) -> (i32, i32) {
    %c0_i32 = arith.constant 0 : i32
    %c0_i32_0 = arith.constant 0 : i32
    %c0_i32_1 = arith.constant 0 : i32
    return %c0_i32, %c0_i32_0 : i32, i32
  }
}

</mosaic_0001>

<llo_original>
// kernel: forward.1
$region0: #{forward.1}
  #allocation0 [shape = 'u32[]', space=smem, size = 0x4, offset = 0x4, fixed_abs, tag = 'smem constant byte address 0x4 - core index']
  #allocation1 [shape = 'u32[144,128]{1,0:T(1,128)}', space=vmem, size = 0x12000, scoped, tag = 'internal scratch']
  #allocation2 [shape = 'f32[32,33]{1,0:T(8,128)}', space=vmem, size = 0x4000, scoped, tag = 'scratch operand']
  %s0 = inlined_call_operand.vmem [shape: f32[32,33], index: 0, kind: input, shape index: {}]
  %s1 = inlined_call_operand.vmem [shape: f32[32,1], index: 1, kind: input, shape index: {}]
  %s2 = inlined_call_operand.vmem [shape: f32[32,33], index: 2, kind: input, shape index: {}]
  %s3 = inlined_call_operand.vmem [shape: bf16[2,6,33,33], index: 3, kind: input, shape index: {}]
  %s4 = inlined_call_operand.vmem [shape: f32[2,10,33], index: 4, kind: input, shape index: {}]
  %s5 = inlined_call_operand.hbm [shape: f32[4,33], index: 5, kind: output, shape index: {}]
  %s6 = sld [smem:[#allocation0]]
  $region61: #{forward.1} parent=0
    _
  %s8 = ssub.s32 1, %s6
  %s9 = scalar_select 0, %s8, %s6
  $region1: #{forward.1} parent=0
    #allocation3 [shape = 'u8[2048]{0}', space=vmem, size = 0x800, scoped, tag = 'output window, operand 0, single buffered']
    #allocation4 [shape = 's32[2]{0}', space=sflag, size = 0x8, scoped, tag = 'scoped memory for forward.1']
    %10 = vsyncpa [#allocation4], 0
    loop: start=0, step=1, limit=4
    $region2: #{forward.1} parent=1 // loop_pre_header
      _
    $region3: #{forward.1} parent=1 // loop_header
      %s12 = sphi 0, %s16
      %p13 = scmp.ge.s32.totalorder %s12, 4
      %s20 = sphi 0, %s20
      %s22 = sphi 0, %s20
      %s23 = sphi 0, %s22
      %s37 = sphi 0, %s23
      %s41 = sphi 0, %s41
      %s43 = sphi 0, %s41
      %s44 = sphi 0, %s43
      %s58 = sphi 0, %s44
      %s62 = sphi 0, %s62
      %s64 = sphi 0, %s62
      %s65 = sphi 0, %s64
      %s79 = sphi 0, %s65
      %s85 = sphi 0, %s87
      %s88 = sphi 0, %s85
      %s89 = sphi 0, %s88
      %s105 = sphi 0, %s89
      %s111 = sphi 0, %s113
      %s114 = sphi 0, %s111
      %s115 = sphi 0, %s114
      %s131 = sphi 0, %s115
      %s135 = sphi 0, %s135
      %s137 = sphi 0, %s135
      %s138 = sphi 0, %s137
      %s152 = sphi 0, %s138
    $region4: #{forward.1} parent=1 // loop_header_branch
      %15 = sbr.rel (%p13) target = $region8
    $region5: #{forward.1} parent=1 // loop_body
      %s17 = ssub.s32 %s12, 1
      %s18 = ssub.s32 %s12, 2
      %s19 = sadd.s32 %s12, 1
      %s21 = sadd.s32 %s20, 1
      %p24 = scmp.eq.s32.totalorder %s12, 1
      %p25 = scmp.ne.s32.totalorder %s20, %s22
      %p26 = scmp.eq.s32.totalorder %s12, 0
      %p27 = por %p25, %p26
      %p28 = scmp.ne.s32.totalorder %s20, %s22
      %p29 = scmp.eq.s32.totalorder %s17, 1
      %p30 = por %p28, %p29
      %p31 = scmp.ne.s32.totalorder %s22, %s23
      %p32 = scmp.eq.s32.totalorder %s17, 0
      %p33 = por %p31, %p32
      %p34 = scmp.ne.s32.totalorder %s22, %s23
      %p35 = scmp.eq.s32.totalorder %s18, 1
      %p36 = por %p34, %p35
      %p38 = scmp.ne.s32.totalorder %s23, %s37
      %p39 = scmp.eq.s32.totalorder %s18, 0
      %p40 = por %p38, %p39
      %s42 = sadd.s32 %s41, 1
      %p45 = scmp.eq.s32.totalorder %s12, 1
      %p46 = scmp.ne.s32.totalorder %s41, %s43
      %p47 = scmp.eq.s32.totalorder %s12, 0
      %p48 = por %p46, %p47
      %p49 = scmp.ne.s32.totalorder %s41, %s43
      %p50 = scmp.eq.s32.totalorder %s17, 1
      %p51 = por %p49, %p50
      %p52 = scmp.ne.s32.totalorder %s43, %s44
      %p53 = scmp.eq.s32.totalorder %s17, 0
      %p54 = por %p52, %p53
      %p55 = scmp.ne.s32.totalorder %s43, %s44
      %p56 = scmp.eq.s32.totalorder %s18, 1
      %p57 = por %p55, %p56
      %p59 = scmp.ne.s32.totalorder %s44, %s58
      %p60 = scmp.eq.s32.totalorder %s18, 0
      %p61 = por %p59, %p60
      %s63 = sadd.s32 %s62, 1
      %p66 = scmp.eq.s32.totalorder %s12, 1
      %p67 = scmp.ne.s32.totalorder %s62, %s64
      %p68 = scmp.eq.s32.totalorder %s12, 0
      %p69 = por %p67, %p68
      %p70 = scmp.ne.s32.totalorder %s62, %s64
      %p71 = scmp.eq.s32.totalorder %s17, 1
      %p72 = por %p70, %p71
      %p73 = scmp.ne.s32.totalorder %s64, %s65
      %p74 = scmp.eq.s32.totalorder %s17, 0
      %p75 = por %p73, %p74
      %p76 = scmp.ne.s32.totalorder %s64, %s65
      %p77 = scmp.eq.s32.totalorder %s18, 1
      %p78 = por %p76, %p77
      %p80 = scmp.ne.s32.totalorder %s65, %s79
      %p81 = scmp.eq.s32.totalorder %s18, 0
      %p82 = por %p80, %p81
      %s83 = ssub.s32 %s12, %s19
      %p84 = scmp.eq.s32.totalorder %s83, 0
      %s86 = sadd.s32 %s85, 1
      %s87 = scalar_select %p84, %s85, %s86
      %p90 = pneg %p84
      %p91 = scmp.eq.s32.totalorder %s12, 1
      %p92 = por %p90, %p91
      %p93 = scmp.ne.s32.totalorder %s85, %s88
      %p94 = scmp.eq.s32.totalorder %s12, 0
      %p95 = por %p93, %p94
      %p96 = scmp.ne.s32.totalorder %s85, %s88
      %p97 = scmp.eq.s32.totalorder %s17, 1
      %p98 = por %p96, %p97
      %p99 = scmp.ne.s32.totalorder %s88, %s89
      %p100 = scmp.eq.s32.totalorder %s17, 0
      %p101 = por %p99, %p100
      %p102 = scmp.ne.s32.totalorder %s88, %s89
      %p103 = scmp.eq.s32.totalorder %s18, 1
      %p104 = por %p102, %p103
      %p106 = scmp.ne.s32.totalorder %s89, %s105
      %p107 = scmp.eq.s32.totalorder %s18, 0
      %p108 = por %p106, %p107
      %s109 = ssub.s32 %s12, %s19
      %p110 = scmp.eq.s32.totalorder %s109, 0
      %s112 = sadd.s32 %s111, 1
      %s113 = scalar_select %p110, %s111, %s112
      %p116 = pneg %p110
      %p117 = scmp.eq.s32.totalorder %s12, 1
      %p118 = por %p116, %p117
      %p119 = scmp.ne.s32.totalorder %s111, %s114
      %p120 = scmp.eq.s32.totalorder %s12, 0
      %p121 = por %p119, %p120
      %p122 = scmp.ne.s32.totalorder %s111, %s114
      %p123 = scmp.eq.s32.totalorder %s17, 1
      %p124 = por %p122, %p123
      %p125 = scmp.ne.s32.totalorder %s114, %s115
      %p126 = scmp.eq.s32.totalorder %s17, 0
      %p127 = por %p125, %p126
      %p128 = scmp.ne.s32.totalorder %s114, %s115
      %p129 = scmp.eq.s32.totalorder %s18, 1
      %p130 = por %p128, %p129
      %p132 = scmp.ne.s32.totalorder %s115, %s131
      %p133 = scmp.eq.s32.totalorder %s18, 0
      %p134 = por %p132, %p133
      %s136 = sadd.s32 %s135, 1
      %p139 = scmp.eq.s32.totalorder %s12, 1
      %p140 = scmp.ne.s32.totalorder %s135, %s137
      %p141 = scmp.eq.s32.totalorder %s12, 0
      %p142 = por %p140, %p141
      %p143 = scmp.ne.s32.totalorder %s135, %s137
      %p144 = scmp.eq.s32.totalorder %s17, 1
      %p145 = por %p143, %p144
      %p146 = scmp.ne.s32.totalorder %s137, %s138
      %p147 = scmp.eq.s32.totalorder %s17, 0
      %p148 = por %p146, %p147
      %p149 = scmp.ne.s32.totalorder %s137, %s138
      %p150 = scmp.eq.s32.totalorder %s18, 1
      %p151 = por %p149, %p150
      %p153 = scmp.ne.s32.totalorder %s138, %s152
      %p154 = scmp.eq.s32.totalorder %s18, 0
      %p155 = por %p153, %p154
      %p156 = scmp.le.s32.totalorder 1, %s12
      %p157 = scmp.lt.s32.totalorder %s12, 3
      %p158 = pnand %p156, %p157
      %p159 = pneg %p158
      // Predicated region
      $region9: #{forward.1} parent=5 // pred_check
        _
      $region10: #{forward.1} parent=5 // pred_check_branch
        %161 = sbr.rel (%p158) target = $region12
      $region11: #{forward.1} parent=5 // pred_region
        %s162 = ssub.s32 %s12, 1
        // Predicated region
        $region13: #{forward.1} parent=11 // pred_check
          %p163 = pneg %p33
        $region14: #{forward.1} parent=11 // pred_check_branch
          %165 = sbr.rel (%p163) target = $region16
        $region15: #{forward.1} parent=11 // pred_region
          _
        $region16: #{forward.1} parent=11 // pred_fallthru
          _
        // Predicated region
        $region17: #{forward.1} parent=11 // pred_check
          %p166 = pneg %p54
        $region18: #{forward.1} parent=11 // pred_check_branch
          %168 = sbr.rel (%p166) target = $region20
        $region19: #{forward.1} parent=11 // pred_region
          _
        $region20: #{forward.1} parent=11 // pred_fallthru
          _
        // Predicated region
        $region21: #{forward.1} parent=11 // pred_check
          %p169 = pneg %p75
        $region22: #{forward.1} parent=11 // pred_check_branch
          %171 = sbr.rel (%p169) target = $region24
        $region23: #{forward.1} parent=11 // pred_region
          _
        $region24: #{forward.1} parent=11 // pred_fallthru
          _
      $region12: #{forward.1} parent=5 // pred_fallthru
        _
      %p172 = scmp.lt.s32.totalorder %s12, 2
      // Predicated region
      $region25: #{forward.1} parent=5 // pred_check
        %p173 = pneg %p172
      $region26: #{forward.1} parent=5 // pred_check_branch
        %175 = sbr.rel (%p173) target = $region28
      $region27: #{forward.1} parent=5 // pred_region
        // Predicated region
        $region29: #{forward.1} parent=27 // pred_check
          %p176 = pneg %p95
        $region30: #{forward.1} parent=27 // pred_check_branch
          %178 = sbr.rel (%p176) target = $region32
        $region31: #{forward.1} parent=27 // pred_region
          %p179 = scmp.lt.s32.totalorder %s12, 1
          %s180 = scalar_select %p179, %s12, 1
          %s181 = smul.addr %s180, 30
          %s182 = smul.addr %s181, 4
          %s183 = scalar_lea.vmem %s3, %s182
        $region32: #{forward.1} parent=27 // pred_fallthru
          _
        // Predicated region
        $region33: #{forward.1} parent=27 // pred_check
          %p184 = pneg %p121
        $region34: #{forward.1} parent=27 // pred_check_branch
          %186 = sbr.rel (%p184) target = $region36
        $region35: #{forward.1} parent=27 // pred_region
          %p187 = scmp.lt.s32.totalorder %s12, 1
          %s188 = scalar_select %p187, %s12, 1
          %s189 = smul.addr %s188, 2
          %s190 = smul.addr %s189, 8
          %s191 = scalar_lea.vmem %s4, %s190
        $region36: #{forward.1} parent=27 // pred_fallthru
          _
      $region28: #{forward.1} parent=5 // pred_fallthru
        _
      %p192 = scmp.le.s32.totalorder 1, %s12
      %p193 = scmp.lt.s32.totalorder %s12, 3
      %p194 = pnand %p192, %p193
      %p195 = pneg %p194
      // Predicated region
      $region37: #{forward.1} parent=5 // pred_check
        _
      $region38: #{forward.1} parent=5 // pred_check_branch
        %197 = sbr.rel (%p194) target = $region40
      $region39: #{forward.1} parent=5 // pred_region
        %s198 = ssub.s32 %s12, 1
        %p199 = pneg %p33
        %p200 = pneg %p30
        %p201 = pneg %p54
        %p202 = pneg %p51
        %p203 = pneg %p75
        %p204 = pneg %p72
        %p205 = scmp.lt.s32.totalorder %s17, 1
        %s206 = scalar_select %p205, %s17, 1
        %s207 = smul.addr %s206, 30
        %s208 = smul.addr %s207, 4
        %s209 = scalar_lea.vmem %s3, %s208
        %p210 = pneg %p101
        %p211 = pneg %p98
        %p212 = scmp.lt.s32.totalorder %s17, 1
        %s213 = scalar_select %p212, %s17, 1
        %s214 = smul.addr %s213, 2
        %s215 = smul.addr %s214, 8
        %s216 = scalar_lea.vmem %s4, %s215
        %p217 = pneg %p127
        %p218 = pneg %p124
        %p219 = pneg %p148
        %p220 = pneg %p145
        %p221 = scmp.lt.s32.totalorder %s17, 1
        %s222 = scalar_select %p221, %s17, 1
        %s223 = smul.addr %s222, 30
        %s224 = smul.addr %s223, 4
        %s225 = scalar_lea.vmem %s3, %s224
        %p226 = scmp.lt.s32.totalorder %s17, 1
        %s227 = scalar_select %p226, %s17, 1
        %s228 = smul.addr %s227, 2
        %s229 = smul.addr %s228, 8
        %s230 = scalar_lea.vmem %s4, %s229
        %p232 = scmp.eq.s32.totalorder %s17, 0
        // Predicated region
        $region41: #{forward.1} parent=39 // pred_check
          %p233 = pneg %p232
        $region42: #{forward.1} parent=39 // pred_check_branch
          %235 = sbr.rel (%p233) target = $region44
        $region43: #{forward.1} parent=39 // pred_region
          %v236 = vld [vmem:[%s0] sm:$0xff]
          %v237 = vld [vmem:[%s0 + $0x8] sm:$0xff]
          %v238 = vld [vmem:[%s0 + $0x10] sm:$0xff]
          %v239 = vld [vmem:[%s0 + $0x18] sm:$0xff]
          %v240 = vld [vmem:[%s1] sm:$0xff]
          %v241 = vld [vmem:[%s1 + $0x8] sm:$0xff]
          %v242 = vld [vmem:[%s1 + $0x10] sm:$0xff]
          %v243 = vld [vmem:[%s1 + $0x18] sm:$0xff]
          %245 = vset.pattern.permute.xlu0 0
          %246 = vperm.xlu0 %245, %v240
          %v247 = vpop.permute.xlu0 %246
          %250 = vset.pattern.permute.xlu0 0
          %251 = vperm.xlu0 %250, %v241
          %v252 = vpop.permute.xlu0 %251
          %255 = vset.pattern.permute.xlu0 0
          %256 = vperm.xlu0 %255, %v242
          %v257 = vpop.permute.xlu0 %256
          %260 = vset.pattern.permute.xlu0 0
          %261 = vperm.xlu0 %260, %v243
          %v262 = vpop.permute.xlu0 %261
          %v264 = vmul.f32 %v236, %v247
          %v265 = vmul.f32 %v237, %v252
          %v266 = vmul.f32 %v238, %v257
          %v267 = vmul.f32 %v239, %v262
          %v268 = vld [vmem:[%s2] sm:$0xff]
          %v269 = vld [vmem:[%s2 + $0x8] sm:$0xff]
          %v270 = vld [vmem:[%s2 + $0x10] sm:$0xff]
          %v271 = vld [vmem:[%s2 + $0x18] sm:$0xff]
          %v272 = vadd.f32 %v264, %v268
          %v273 = vadd.f32 %v265, %v269
          %v274 = vadd.f32 %v266, %v270
          %v275 = vadd.f32 %v267, %v271
          %vm276 = vcmask 269312
          %277 = vst.msk [vmem:[#allocation2] sm:$0xff] %vm276, %v272
          %278 = vst.msk [vmem:[#allocation2 + $0x8] sm:$0xff] %vm276, %v273
          %279 = vst.msk [vmem:[#allocation2 + $0x10] sm:$0xff] %vm276, %v274
          %280 = vst.msk [vmem:[#allocation2 + $0x18] sm:$0xff] %vm276, %v275
        $region44: #{forward.1} parent=39 // pred_fallthru
          _
        %v281 = vld [vmem:[#allocation2] sm:$0xff]
        %v282 = vld [vmem:[#allocation2 + $0x8] sm:$0xff]
        %v283 = vld [vmem:[#allocation2 + $0x10] sm:$0xff]
        %v284 = vld [vmem:[#allocation2 + $0x18] sm:$0xff]
        %v285 = vld [vmem:[%s225] sm:$0xf]
        %v286 = vld [vmem:[%s225 + $0x4] sm:$0xf]
        %v287 = vld [vmem:[%s225 + $0x8] sm:$0xf]
        %v288 = vld [vmem:[%s225 + $0xc] sm:$0xf]
        %v289 = vld [vmem:[%s225 + $0x10] sm:$0x1]
        %v290 = vld [vmem:[%s225 + $0x14] sm:$0xf]
        %v291 = vld [vmem:[%s225 + $0x18] sm:$0xf]
        %v292 = vld [vmem:[%s225 + $0x1c] sm:$0xf]
        %v293 = vld [vmem:[%s225 + $0x20] sm:$0xf]
        %v294 = vld [vmem:[%s225 + $0x24] sm:$0x1]
        %v295 = vld [vmem:[%s225 + $0x28] sm:$0xf]
        %v296 = vld [vmem:[%s225 + $0x2c] sm:$0xf]
        %v297 = vld [vmem:[%s225 + $0x30] sm:$0xf]
        %v298 = vld [vmem:[%s225 + $0x34] sm:$0xf]
        %v299 = vld [vmem:[%s225 + $0x38] sm:$0x1]
        %v300 = vld [vmem:[%s225 + $0x3c] sm:$0xf]
        %v301 = vld [vmem:[%s225 + $0x40] sm:$0xf]
        %v302 = vld [vmem:[%s225 + $0x44] sm:$0xf]
        %v303 = vld [vmem:[%s225 + $0x48] sm:$0xf]
        %v304 = vld [vmem:[%s225 + $0x4c] sm:$0x1]
        %v305 = vld [vmem:[%s225 + $0x50] sm:$0xf]
        %v306 = vld [vmem:[%s225 + $0x54] sm:$0xf]
        %v307 = vld [vmem:[%s225 + $0x58] sm:$0xf]
        %v308 = vld [vmem:[%s225 + $0x5c] sm:$0xf]
        %v309 = vld [vmem:[%s225 + $0x60] sm:$0x1]
        %v310 = vld [vmem:[%s225 + $0x64] sm:$0xf]
        %v311 = vld [vmem:[%s225 + $0x68] sm:$0xf]
        %v312 = vld [vmem:[%s225 + $0x6c] sm:$0xf]
        %v313 = vld [vmem:[%s225 + $0x70] sm:$0xf]
        %v314 = vld [vmem:[%s225 + $0x74] sm:$0x1]
        %v315 = vld [vmem:[%s230] sm:$0xff]
        %v316 = vld [vmem:[%s230 + $0x8] sm:$0x3]
        %v317 = vpack.c.bf16 %v282, %v281
        %v318 = vpack.c.bf16 %v284, %v283
        %v319 = vlaneseq
        %v320 = vshrl.u32 %v319, 7
        %v321 = vsub.s32 0, %v320
        %v322 = vrot.slane %v315, %v321
        %v328 = vunpack.c.l.b16 %v285
        %v329 = vunpack.c.l.b16 %v286
        %v330 = vunpack.c.l.b16 %v287
        %v331 = vunpack.c.l.b16 %v288
        %v332 = vunpack.c.l.b16 %v289
        %v333 = vpack.c.b16 %v329, %v328
        %v334 = vpack.c.b16 %v331, %v330
        %v335 = vpack.c.b16 %v332, %v332
        %vm338 = vcmask 269312
        %v340 = vsel %vm338, %v317, 0
        %v343 = vsel %vm338, %v318, 0
        %vm345 = vcmask 1040384
        %v346 = vsel 0, 4294967295, 65535
        %v347 = vsel %vm345, %v346, 0
        %v349 = vand.u32 %v335, %v347
        %351 = vmatprep.subr.bf16.mxu0 0
        %352 = vmatpush1.bf16.msra.mxu0 0
        %353 = vmatprep.subr.bf16.mxu0 0
        %354 = vmatpush1.bf16.msra.mxu0 0
        %355 = vmatprep.subr.bf16.mxu0 0
        %356 = vmatpush1.bf16.msra.mxu0 0
        %357 = vmatprep.subr.bf16.mxu0 0
        %358 = vmatpush1.bf16.msra.mxu0 0
        %359 = vmatprep.subr.bf16.mxu0 0
        %360 = vmatpush1.bf16.msra.mxu0 0
        %361 = vmatprep.subr.bf16.mxu0 0
        %362 = vmatpush1.bf16.msra.mxu0 %v349
        %363 = vmatprep.subr.bf16.mxu0 0
        %364 = vmatpush1.bf16.msra.mxu0 %v334
        %365 = vmatprep.subr.bf16.mxu0 0
        %366 = vmatpush1.bf16.msra.mxu0 %v333
        %367 = vmatprep.subr.bf16.mxu0 0
        %368 = vmatpush2.bf16.msra.mxu0 0
        %369 = vmatprep.subr.bf16.mxu0 0
        %370 = vmatpush2.bf16.msra.mxu0 0
        %371 = vmatprep.subr.bf16.mxu0 0
        %372 = vmatpush2.bf16.msra.mxu0 0
        %373 = vmatprep.subr.bf16.mxu0 0
        %374 = vmatpush2.bf16.msra.mxu0 0
        %375 = vmatprep.subr.bf16.mxu0 0
        %376 = vmatpush2.bf16.msra.mxu0 0
        %377 = vmatprep.subr.bf16.mxu0 0
        %378 = vmatpush2.bf16.msra.mxu0 0
        %379 = vmatprep.subr.bf16.mxu0 0
        %380 = vmatpush2.bf16.msra.mxu0 0
        %381 = vmatprep.subr.bf16.mxu0 0
        %382 = vmatpush2.bf16.msra.mxu0 0
        %383 = vmatprep.mubr.bf16.mxu0 0
        %384 = vmatmul.mubr.bf16.gmra.mxu0 %v340
        %v385 = vpop.f32.mrf.mxu0
        %v386 = vadd.f32 %v322, %v385
        %v387 = vpop.f32.mrf.mxu0
        %v388 = vpop.f32.mrf.mxu0
        %v389 = vadd.f32 %v322, %v388
        %v390 = vpop.f32.mrf.mxu0
        %391 = vmatprep.mubr.bf16.mxu0 0
        %392 = vmatmul.mubr.bf16.gmra.mxu0 %v343
        %v393 = vpop.f32.mrf.mxu0
        %v394 = vadd.f32 %v322, %v393
        %v395 = vpop.f32.mrf.mxu0
        %v396 = vpop.f32.mrf.mxu0
        %v397 = vadd.f32 %v322, %v396
        %v398 = vpop.f32.mrf.mxu0
        %399 = vdwg.mxu0
        %v400 = vlaneseq
        %v401 = vshrl.u32 %v400, 7
        %v402 = vsub.s32 1, %v401
        %v403 = vrot.slane %v315, %v402
        %v409 = vunpack.c.l.b16 %v290
        %v410 = vunpack.c.l.b16 %v291
        %v411 = vunpack.c.l.b16 %v292
        %v412 = vunpack.c.l.b16 %v293
        %v413 = vunpack.c.l.b16 %v294
        %v414 = vpack.c.b16 %v410, %v409
        %v415 = vpack.c.b16 %v412, %v411
        %v416 = vpack.c.b16 %v413, %v413
        %v420 = vand.u32 %v416, %v347
        %422 = vmatprep.subr.bf16.mxu0 0
        %423 = vmatpush1.bf16.msra.mxu0 0
        %424 = vmatprep.subr.bf16.mxu0 0
        %425 = vmatpush1.bf16.msra.mxu0 0
        %426 = vmatprep.subr.bf16.mxu0 0
        %427 = vmatpush1.bf16.msra.mxu0 0
        %428 = vmatprep.subr.bf16.mxu0 0
        %429 = vmatpush1.bf16.msra.mxu0 0
        %430 = vmatprep.subr.bf16.mxu0 0
        %431 = vmatpush1.bf16.msra.mxu0 0
        %432 = vmatprep.subr.bf16.mxu0 0
        %433 = vmatpush1.bf16.msra.mxu0 %v420
        %434 = vmatprep.subr.bf16.mxu0 0
        %435 = vmatpush1.bf16.msra.mxu0 %v415
        %436 = vmatprep.subr.bf16.mxu0 0
        %437 = vmatpush1.bf16.msra.mxu0 %v414
        %438 = vmatprep.subr.bf16.mxu0 0
        %439 = vmatpush2.bf16.msra.mxu0 0
        %440 = vmatprep.subr.bf16.mxu0 0
        %441 = vmatpush2.bf16.msra.mxu0 0
        %442 = vmatprep.subr.bf16.mxu0 0
        %443 = vmatpush2.bf16.msra.mxu0 0
        %444 = vmatprep.subr.bf16.mxu0 0
        %445 = vmatpush2.bf16.msra.mxu0 0
        %446 = vmatprep.subr.bf16.mxu0 0
        %447 = vmatpush2.bf16.msra.mxu0 0
        %448 = vmatprep.subr.bf16.mxu0 0
        %449 = vmatpush2.bf16.msra.mxu0 0
        %450 = vmatprep.subr.bf16.mxu0 0
        %451 = vmatpush2.bf16.msra.mxu0 0
        %452 = vmatprep.subr.bf16.mxu0 0
        %453 = vmatpush2.bf16.msra.mxu0 0
        %454 = vmatprep.mubr.bf16.mxu0 0
        %455 = vmatmul.mubr.bf16.gmra.mxu0 %v340
        %v456 = vpop.f32.mrf.mxu0
        %v457 = vadd.f32 %v403, %v456
        %v458 = vpop.f32.mrf.mxu0
        %v459 = vpop.f32.mrf.mxu0
        %v460 = vadd.f32 %v403, %v459
        %v461 = vpop.f32.mrf.mxu0
        %462 = vmatprep.mubr.bf16.mxu0 0
        %463 = vmatmul.mubr.bf16.gmra.mxu0 %v343
        %v464 = vpop.f32.mrf.mxu0
        %v465 = vadd.f32 %v403, %v464
        %v466 = vpop.f32.mrf.mxu0
        %v467 = vpop.f32.mrf.mxu0
        %v468 = vadd.f32 %v403, %v467
        %v469 = vpop.f32.mrf.mxu0
        %470 = vdwg.mxu0
        %v471 = vlaneseq
        %v472 = vshrl.u32 %v471, 7
        %v473 = vsub.s32 2, %v472
        %v474 = vrot.slane %v315, %v473
        %v480 = vunpack.c.l.b16 %v295
        %v481 = vunpack.c.l.b16 %v296
        %v482 = vunpack.c.l.b16 %v297
        %v483 = vunpack.c.l.b16 %v298
        %v484 = vunpack.c.l.b16 %v299
        %v485 = vpack.c.b16 %v481, %v480
        %v486 = vpack.c.b16 %v483, %v482
        %v487 = vpack.c.b16 %v484, %v484
        %v491 = vand.u32 %v487, %v347
        %493 = vmatprep.subr.bf16.mxu0 0
        %494 = vmatpush1.bf16.msra.mxu0 0
        %495 = vmatprep.subr.bf16.mxu0 0
        %496 = vmatpush1.bf16.msra.mxu0 0
        %497 = vmatprep.subr.bf16.mxu0 0
        %498 = vmatpush1.bf16.msra.mxu0 0
        %499 = vmatprep.subr.bf16.mxu0 0
        %500 = vmatpush1.bf16.msra.mxu0 0
        %501 = vmatprep.subr.bf16.mxu0 0
        %502 = vmatpush1.bf16.msra.mxu0 0
        %503 = vmatprep.subr.bf16.mxu0 0
        %504 = vmatpush1.bf16.msra.mxu0 %v491
        %505 = vmatprep.subr.bf16.mxu0 0
        %506 = vmatpush1.bf16.msra.mxu0 %v486
        %507 = vmatprep.subr.bf16.mxu0 0
        %508 = vmatpush1.bf16.msra.mxu0 %v485
        %509 = vmatprep.subr.bf16.mxu0 0
        %510 = vmatpush2.bf16.msra.mxu0 0
        %511 = vmatprep.subr.bf16.mxu0 0
        %512 = vmatpush2.bf16.msra.mxu0 0
        %513 = vmatprep.subr.bf16.mxu0 0
        %514 = vmatpush2.bf16.msra.mxu0 0
        %515 = vmatprep.subr.bf16.mxu0 0
        %516 = vmatpush2.bf16.msra.mxu0 0
        %517 = vmatprep.subr.bf16.mxu0 0
        %518 = vmatpush2.bf16.msra.mxu0 0
        %519 = vmatprep.subr.bf16.mxu0 0
        %520 = vmatpush2.bf16.msra.mxu0 0
        %521 = vmatprep.subr.bf16.mxu0 0
        %522 = vmatpush2.bf16.msra.mxu0 0
        %523 = vmatprep.subr.bf16.mxu0 0
        %524 = vmatpush2.bf16.msra.mxu0 0
        %525 = vmatprep.mubr.bf16.mxu0 0
        %526 = vmatmul.mubr.bf16.gmra.mxu0 %v340
        %v527 = vpop.f32.mrf.mxu0
        %v528 = vadd.f32 %v474, %v527
        %v529 = vpop.f32.mrf.mxu0
        %v530 = vpop.f32.mrf.mxu0
        %v531 = vadd.f32 %v474, %v530
        %v532 = vpop.f32.mrf.mxu0
        %533 = vmatprep.mubr.bf16.mxu0 0
        %534 = vmatmul.mubr.bf16.gmra.mxu0 %v343
        %v535 = vpop.f32.mrf.mxu0
        %v536 = vadd.f32 %v474, %v535
        %v537 = vpop.f32.mrf.mxu0
        %v538 = vpop.f32.mrf.mxu0
        %v539 = vadd.f32 %v474, %v538
        %v540 = vpop.f32.mrf.mxu0
        %541 = vdwg.mxu0
        %v542 = vlaneseq
        %v543 = vshrl.u32 %v542, 7
        %v544 = vadd.s32 %v543, 8
        %v545 = vadd.s32 %v543, 16
        %v546 = vadd.s32 %v543, 24
        %v547 = vlaneseq
        %v548 = vand.u32 %v547, 127
        %vm549 = vcmp.lt.s32.totalorder %v543, 0
        %v550 = vsub.s32 0, %v543
        %v551 = vsel %vm549, %v550, %v543
        %v552 = vshrl.u32 %v551, 2
        %v553 = vand.u32 %v551, 3
        %v554 = vsub.s32 0, %v553
        %v555 = vsel %vm549, %v554, %v553
        %vm556 = vcmp.lt.s32.totalorder %v544, 0
        %v557 = vsub.s32 0, %v544
        %v558 = vsel %vm556, %v557, %v544
        %v559 = vshrl.u32 %v558, 2
        %v560 = vand.u32 %v558, 3
        %v561 = vsub.s32 0, %v560
        %v562 = vsel %vm556, %v561, %v560
        %vm563 = vcmp.lt.s32.totalorder %v545, 0
        %v564 = vsub.s32 0, %v545
        %v565 = vsel %vm563, %v564, %v545
        %v566 = vshrl.u32 %v565, 2
        %v567 = vand.u32 %v565, 3
        %v568 = vsub.s32 0, %v567
        %v569 = vsel %vm563, %v568, %v567
        %vm570 = vcmp.lt.s32.totalorder %v546, 0
        %v571 = vsub.s32 0, %v546
        %v572 = vsel %vm570, %v571, %v546
        %v573 = vshrl.u32 %v572, 2
        %v574 = vand.u32 %v572, 3
        %v575 = vsub.s32 0, %v574
        %v576 = vsel %vm570, %v575, %v574
        %vm577 = vcmp.ne.s32.totalorder %v555, 0
        %vm578 = vcmp.ne.s32.totalorder %v562, 0
        %vm579 = vcmp.ne.s32.totalorder %v569, 0
        %vm580 = vcmp.ne.s32.totalorder %v576, 0
        %vm581 = vcmp.lt.s32.totalorder %v555, 0
        %vm582 = vcmp.lt.s32.totalorder %v562, 0
        %vm583 = vcmp.lt.s32.totalorder %v569, 0
        %vm584 = vcmp.lt.s32.totalorder %v576, 0
        %vm585 = vmand %vm581, %vm577
        %vm586 = vmand %vm582, %vm578
        %vm587 = vmand %vm583, %vm579
        %vm588 = vmand %vm584, %vm580
        %v589 = vadd.s32 %v555, 4
        %v590 = vadd.s32 %v562, 4
        %v591 = vadd.s32 %v569, 4
        %v592 = vadd.s32 %v576, 4
        %v593 = vsel %vm585, %v589, %v555
        %v594 = vsel %vm586, %v590, %v562
        %v595 = vsel %vm587, %v591, %v569
        %v596 = vsel %vm588, %v592, %v576
        %vm597 = vcmp.lt.s32.totalorder %v548, 0
        %v598 = vsub.s32 0, %v548
        %v599 = vsel %vm597, %v598, %v548
        %v600 = vshrl.u32 %v599, 2
        %v601 = vand.u32 %v599, 3
        %v602 = vsub.s32 0, %v601
        %v603 = vsel %vm597, %v602, %v601
        %vm604 = vcmp.ne.s32.totalorder %v603, 0
        %vm605 = vcmp.lt.s32.totalorder %v603, 0
        %vm606 = vmand %vm605, %vm604
        %v607 = vadd.s32 %v603, 4
        %v608 = vsel %vm606, %v607, %v603
        %vm609 = vcmp.eq.s32.totalorder %v593, %v608
        %vm610 = vcmp.eq.s32.totalorder %v594, %v608
        %vm611 = vcmp.eq.s32.totalorder %v595, %v608
        %vm612 = vcmp.eq.s32.totalorder %v596, %v608
        %v613 = vsel %vm609, 0.0, -1e+30
        %v614 = vsel %vm610, 0.0, -1e+30
        %v615 = vsel %vm611, 0.0, -1e+30
        %v616 = vsel %vm612, 0.0, -1e+30
        %v618 = vsel %vm338, %v386, 0
        %v621 = vsel %vm338, %v389, 0
        %v624 = vsel %vm338, %v394, 0
        %v627 = vsel %vm338, %v397, 0
        %v630 = vsel %vm338, %v457, 0
        %v633 = vsel %vm338, %v460, 0
        %v636 = vsel %vm338, %v465, 0
        %v639 = vsel %vm338, %v468, 0
        %641 = vmatprep.subr.mxu0 0.0
        %642 = vmatpush1.xpose.msra.mxu0 0.0
        %643 = vmatprep.subr.mxu0 0.0
        %644 = vmatpush1.xpose.msra.mxu0 0.0
        %645 = vmatprep.subr.mxu0 0.0
        %646 = vmatpush1.xpose.msra.mxu0 0.0
        %647 = vmatprep.subr.mxu0 0.0
        %648 = vmatpush1.xpose.msra.mxu0 0.0
        %649 = vmatprep.subr.mxu0 0.0
        %650 = vmatpush1.xpose.msra.mxu0 0.0
        %651 = vmatprep.subr.mxu0 0.0
        %652 = vmatpush1.xpose.msra.mxu0 0.0
        %653 = vmatprep.subr.mxu0 0.0
        %654 = vmatpush1.xpose.msra.mxu0 0.0
        %655 = vmatprep.subr.mxu0 0.0
        %656 = vmatpush1.xpose.msra.mxu0 0.0
        %657 = vmatprep.subr.mxu0 0.0
        %658 = vmatpush1.xpose.msra.mxu0 0.0
        %659 = vmatprep.subr.mxu0 0.0
        %660 = vmatpush1.xpose.msra.mxu0 0.0
        %661 = vmatprep.subr.mxu0 0.0
        %662 = vmatpush1.xpose.msra.mxu0 0.0
        %663 = vmatprep.subr.mxu0 0.0
        %664 = vmatpush1.xpose.msra.mxu0 0.0
        %665 = vmatprep.subr.mxu0 0.0
        %666 = vmatpush1.xpose.msra.mxu0 %v639
        %667 = vmatprep.subr.mxu0 0.0
        %668 = vmatpush1.xpose.msra.mxu0 %v636
        %669 = vmatprep.subr.mxu0 0.0
        %670 = vmatpush1.xpose.msra.mxu0 %v633
        %671 = vmatprep.subr.mxu0 0.0
        %672 = vmatpush1.xpose.msra.mxu0 %v630
        %673 = vmatprep.subr.mxu0 0.0
        %674 = vmatpush2.xpose.msra.mxu0 0.0
        %675 = vmatprep.subr.mxu0 0.0
        %676 = vmatpush2.xpose.msra.mxu0 0.0
        %677 = vmatprep.subr.mxu0 0.0
        %678 = vmatpush2.xpose.msra.mxu0 0.0
        %679 = vmatprep.subr.mxu0 0.0
        %680 = vmatpush2.xpose.msra.mxu0 0.0
        %681 = vmatprep.subr.mxu0 0.0
        %682 = vmatpush2.xpose.msra.mxu0 0.0
        %683 = vmatprep.subr.mxu0 0.0
        %684 = vmatpush2.xpose.msra.mxu0 0.0
        %685 = vmatprep.subr.mxu0 0.0
        %686 = vmatpush2.xpose.msra.mxu0 0.0
        %687 = vmatprep.subr.mxu0 0.0
        %688 = vmatpush2.xpose.msra.mxu0 0.0
        %689 = vmatprep.subr.mxu0 0.0
        %690 = vmatpush2.xpose.msra.mxu0 0.0
        %691 = vmatprep.subr.mxu0 0.0
        %692 = vmatpush2.xpose.msra.mxu0 0.0
        %693 = vmatprep.subr.mxu0 0.0
        %694 = vmatpush2.xpose.msra.mxu0 0.0
        %695 = vmatprep.subr.mxu0 0.0
        %696 = vmatpush2.xpose.msra.mxu0 0.0
        %697 = vmatprep.subr.mxu0 0.0
        %698 = vmatpush2.xpose.msra.mxu0 0.0
        %699 = vmatprep.subr.mxu0 0.0
        %700 = vmatpush2.xpose.msra.mxu0 0.0
        %701 = vmatprep.subr.mxu0 0.0
        %702 = vmatpush2.xpose.msra.mxu0 0.0
        %703 = vmatprep.subr.mxu0 0.0
        %704 = vmatpush2.xpose.msra.mxu0 0.0
        %705 = vmatprep.mubr.f32.mxu0 0.0
        %706 = vmatmul.mubr.f32.gmra.mxu0 %v618
        %v707 = vpop.f32.mrf.mxu0
        %v708 = vadd.f32 0.0, %v707
        %v709 = vpop.f32.mrf.mxu0
        %710 = vmatprep.mubr.f32.mxu0 0.0
        %711 = vmatmul.mubr.f32.gmra.mxu0 %v621
        %v712 = vpop.f32.mrf.mxu0
        %v713 = vadd.f32 0.0, %v712
        %v714 = vpop.f32.mrf.mxu0
        %715 = vmatprep.mubr.f32.mxu0 0.0
        %716 = vmatmul.mubr.f32.gmra.mxu0 %v624
        %v717 = vpop.f32.mrf.mxu0
        %v718 = vadd.f32 0.0, %v717
        %v719 = vpop.f32.mrf.mxu0
        %720 = vmatprep.mubr.f32.mxu0 0.0
        %721 = vmatmul.mubr.f32.gmra.mxu0 %v627
        %v722 = vpop.f32.mrf.mxu0
        %v723 = vadd.f32 0.0, %v722
        %v724 = vpop.f32.mrf.mxu0
        %725 = vdwg.mxu0
        %v726 = vmul.f32 %v708, 0.17407766
        %v727 = vmul.f32 %v713, 0.17407766
        %v728 = vmul.f32 %v718, 0.17407766
        %v729 = vmul.f32 %v723, 0.17407766
        %v730 = vadd.f32 %v726, %v613
        %v731 = vadd.f32 %v727, %v614
        %v732 = vadd.f32 %v728, %v615
        %v733 = vadd.f32 %v729, %v616
        %vm734 = vcmask 261120
        %v735 = vsel %vm734, %v730, -inf
        %736 = vmax.xlane.f32.xlu0 %v735
        %v737 = vpop.xlane.xlu0 %736
        %v738 = vsel %vm734, %v731, -inf
        %739 = vmax.xlane.f32.xlu0 %v738
        %v740 = vpop.xlane.xlu0 %739
        %v741 = vsel %vm734, %v732, -inf
        %742 = vmax.xlane.f32.xlu0 %v741
        %v743 = vpop.xlane.xlu0 %742
        %v744 = vsel %vm734, %v733, -inf
        %745 = vmax.xlane.f32.xlu0 %v744
        %v746 = vpop.xlane.xlu0 %745
        %v747 = vsub.f32 %v730, %v737
        %v748 = vsub.f32 %v731, %v740
        %v749 = vsub.f32 %v732, %v743
        %v750 = vsub.f32 %v733, %v746
        %v751 = vmul.f32 %v747, 1.442695
        %v752 = vpow.pop %v751
        %v753 = vmul.f32 %v748, 1.442695
        %v754 = vpow.pop %v753
        %v755 = vmul.f32 %v749, 1.442695
        %v756 = vpow.pop %v755
        %v757 = vmul.f32 %v750, 1.442695
        %v758 = vpow.pop %v757
        %v759 = vsel %vm734, %v752, 0.0
        %760 = vadd.xlane.f32.xlu0 %v759
        %v761 = vpop.xlane.xlu0 %760
        %v762 = vsel %vm734, %v754, 0.0
        %763 = vadd.xlane.f32.xlu0 %v762
        %v764 = vpop.xlane.xlu0 %763
        %v765 = vsel %vm734, %v756, 0.0
        %766 = vadd.xlane.f32.xlu0 %v765
        %v767 = vpop.xlane.xlu0 %766
        %v768 = vsel %vm734, %v758, 0.0
        %769 = vadd.xlane.f32.xlu0 %v768
        %v770 = vpop.xlane.xlu0 %769
        %v771 = vrcp.pop %v761
        %v772 = vrcp.pop %v764
        %v773 = vrcp.pop %v767
        %v774 = vrcp.pop %v770
        %v775 = vmul.f32 %v752, %v771
        %v776 = vmul.f32 %v754, %v772
        %v777 = vmul.f32 %v756, %v773
        %v778 = vmul.f32 %v758, %v774
        %v780 = vsel %vm734, %v775, 0
        %v783 = vsel %vm734, %v776, 0
        %v786 = vsel %vm734, %v777, 0
        %v789 = vsel %vm734, %v778, 0
        %791 = vmatprep.subr.mxu0 0.0
        %792 = vmatpush1.msra.mxu0 0.0
        %793 = vmatprep.subr.mxu0 0.0
        %794 = vmatpush1.msra.mxu0 0.0
        %795 = vmatprep.subr.mxu0 0.0
        %796 = vmatpush1.msra.mxu0 0.0
        %797 = vmatprep.subr.mxu0 0.0
        %798 = vmatpush1.msra.mxu0 0.0
        %799 = vmatprep.subr.mxu0 0.0
        %800 = vmatpush1.msra.mxu0 0.0
        %801 = vmatprep.subr.mxu0 0.0
        %802 = vmatpush1.msra.mxu0 0.0
        %803 = vmatprep.subr.mxu0 0.0
        %804 = vmatpush1.msra.mxu0 0.0
        %805 = vmatprep.subr.mxu0 0.0
        %806 = vmatpush1.msra.mxu0 0.0
        %807 = vmatprep.subr.mxu0 0.0
        %808 = vmatpush1.msra.mxu0 0.0
        %809 = vmatprep.subr.mxu0 0.0
        %810 = vmatpush1.msra.mxu0 0.0
        %811 = vmatprep.subr.mxu0 0.0
        %812 = vmatpush1.msra.mxu0 0.0
        %813 = vmatprep.subr.mxu0 0.0
        %814 = vmatpush1.msra.mxu0 0.0
        %815 = vmatprep.subr.mxu0 0.0
        %816 = vmatpush1.msra.mxu0 %v539
        %817 = vmatprep.subr.mxu0 0.0
        %818 = vmatpush1.msra.mxu0 %v536
        %819 = vmatprep.subr.mxu0 0.0
        %820 = vmatpush1.msra.mxu0 %v531
        %821 = vmatprep.subr.mxu0 0.0
        %822 = vmatpush1.msra.mxu0 %v528
        %823 = vmatprep.subr.mxu0 0.0
        %824 = vmatpush2.msra.mxu0 0.0
        %825 = vmatprep.subr.mxu0 0.0
        %826 = vmatpush2.msra.mxu0 0.0
        %827 = vmatprep.subr.mxu0 0.0
        %828 = vmatpush2.msra.mxu0 0.0
        %829 = vmatprep.subr.mxu0 0.0
        %830 = vmatpush2.msra.mxu0 0.0
        %831 = vmatprep.subr.mxu0 0.0
        %832 = vmatpush2.msra.mxu0 0.0
        %833 = vmatprep.subr.mxu0 0.0
        %834 = vmatpush2.msra.mxu0 0.0
        %835 = vmatprep.subr.mxu0 0.0
        %836 = vmatpush2.msra.mxu0 0.0
        %837 = vmatprep.subr.mxu0 0.0
        %838 = vmatpush2.msra.mxu0 0.0
        %839 = vmatprep.subr.mxu0 0.0
        %840 = vmatpush2.msra.mxu0 0.0
        %841 = vmatprep.subr.mxu0 0.0
        %842 = vmatpush2.msra.mxu0 0.0
        %843 = vmatprep.subr.mxu0 0.0
        %844 = vmatpush2.msra.mxu0 0.0
        %845 = vmatprep.subr.mxu0 0.0
        %846 = vmatpush2.msra.mxu0 0.0
        %847 = vmatprep.subr.mxu0 0.0
        %848 = vmatpush2.msra.mxu0 0.0
        %849 = vmatprep.subr.mxu0 0.0
        %850 = vmatpush2.msra.mxu0 0.0
        %851 = vmatprep.subr.mxu0 0.0
        %852 = vmatpush2.msra.mxu0 0.0
        %853 = vmatprep.subr.mxu0 0.0
        %854 = vmatpush2.msra.mxu0 0.0
        %855 = vmatprep.mubr.f32.mxu0 0.0
        %856 = vmatmul.mubr.f32.gmra.mxu0 %v780
        %v857 = vpop.f32.mrf.mxu0
        %v858 = vadd.f32 0.0, %v857
        %v859 = vpop.f32.mrf.mxu0
        %860 = vmatprep.mubr.f32.mxu0 0.0
        %861 = vmatmul.mubr.f32.gmra.mxu0 %v783
        %v862 = vpop.f32.mrf.mxu0
        %v863 = vadd.f32 0.0, %v862
        %v864 = vpop.f32.mrf.mxu0
        %865 = vmatprep.mubr.f32.mxu0 0.0
        %866 = vmatmul.mubr.f32.gmra.mxu0 %v786
        %v867 = vpop.f32.mrf.mxu0
        %v868 = vadd.f32 0.0, %v867
        %v869 = vpop.f32.mrf.mxu0
        %870 = vmatprep.mubr.f32.mxu0 0.0
        %871 = vmatmul.mubr.f32.gmra.mxu0 %v789
        %v872 = vpop.f32.mrf.mxu0
        %v873 = vadd.f32 0.0, %v872
        %v874 = vpop.f32.mrf.mxu0
        %875 = vdwg.mxu0
        %v876 = vpack.c.bf16 %v863, %v858
        %v877 = vpack.c.bf16 %v873, %v868
        %v878 = vlaneseq
        %v879 = vshrl.u32 %v878, 7
        %v880 = vsub.s32 3, %v879
        %v881 = vrot.slane %v315, %v880
        %v887 = vunpack.c.l.b16 %v300
        %v888 = vunpack.c.l.b16 %v301
        %v889 = vunpack.c.l.b16 %v302
        %v890 = vunpack.c.l.b16 %v303
        %v891 = vunpack.c.l.b16 %v304
        %v892 = vpack.c.b16 %v888, %v887
        %v893 = vpack.c.b16 %v890, %v889
        %v894 = vpack.c.b16 %v891, %v891
        %v898 = vsel %vm338, %v876, 0
        %v901 = vsel %vm338, %v877, 0
        %v904 = vand.u32 %v894, %v347
        %906 = vmatprep.subr.bf16.mxu0 0
        %907 = vmatpush1.bf16.msra.mxu0 0
        %908 = vmatprep.subr.bf16.mxu0 0
        %909 = vmatpush1.bf16.msra.mxu0 0
        %910 = vmatprep.subr.bf16.mxu0 0
        %911 = vmatpush1.bf16.msra.mxu0 0
        %912 = vmatprep.subr.bf16.mxu0 0
        %913 = vmatpush1.bf16.msra.mxu0 0
        %914 = vmatprep.subr.bf16.mxu0 0
        %915 = vmatpush1.bf16.msra.mxu0 0
        %916 = vmatprep.subr.bf16.mxu0 0
        %917 = vmatpush1.bf16.msra.mxu0 %v904
        %918 = vmatprep.subr.bf16.mxu0 0
        %919 = vmatpush1.bf16.msra.mxu0 %v893
        %920 = vmatprep.subr.bf16.mxu0 0
        %921 = vmatpush1.bf16.msra.mxu0 %v892
        %922 = vmatprep.subr.bf16.mxu0 0
        %923 = vmatpush2.bf16.msra.mxu0 0
        %924 = vmatprep.subr.bf16.mxu0 0
        %925 = vmatpush2.bf16.msra.mxu0 0
        %926 = vmatprep.subr.bf16.mxu0 0
        %927 = vmatpush2.bf16.msra.mxu0 0
        %928 = vmatprep.subr.bf16.mxu0 0
        %929 = vmatpush2.bf16.msra.mxu0 0
        %930 = vmatprep.subr.bf16.mxu0 0
        %931 = vmatpush2.bf16.msra.mxu0 0
        %932 = vmatprep.subr.bf16.mxu0 0
        %933 = vmatpush2.bf16.msra.mxu0 0
        %934 = vmatprep.subr.bf16.mxu0 0
        %935 = vmatpush2.bf16.msra.mxu0 0
        %936 = vmatprep.subr.bf16.mxu0 0
        %937 = vmatpush2.bf16.msra.mxu0 0
        %938 = vmatprep.mubr.bf16.mxu0 0
        %939 = vmatmul.mubr.bf16.gmra.mxu0 %v898
        %v940 = vpop.f32.mrf.mxu0
        %v941 = vadd.f32 %v881, %v940
        %v942 = vpop.f32.mrf.mxu0
        %v943 = vpop.f32.mrf.mxu0
        %v944 = vadd.f32 %v881, %v943
        %v945 = vpop.f32.mrf.mxu0
        %946 = vmatprep.mubr.bf16.mxu0 0
        %947 = vmatmul.mubr.bf16.gmra.mxu0 %v901
        %v948 = vpop.f32.mrf.mxu0
        %v949 = vadd.f32 %v881, %v948
        %v950 = vpop.f32.mrf.mxu0
        %v951 = vpop.f32.mrf.mxu0
        %v952 = vadd.f32 %v881, %v951
        %v953 = vpop.f32.mrf.mxu0
        %954 = vdwg.mxu0
        %v955 = vadd.f32 %v281, %v941
        %v956 = vadd.f32 %v282, %v944
        %v957 = vadd.f32 %v283, %v949
        %v958 = vadd.f32 %v284, %v952
        %v959 = vsel %vm338, %v955, 0.0
        %960 = vadd.xlane.f32.xlu0 %v959
        %v961 = vpop.xlane.xlu0 %960
        %v962 = vsel %vm338, %v956, 0.0
        %963 = vadd.xlane.f32.xlu0 %v962
        %v964 = vpop.xlane.xlu0 %963
        %v965 = vsel %vm338, %v957, 0.0
        %966 = vadd.xlane.f32.xlu0 %v965
        %v967 = vpop.xlane.xlu0 %966
        %v968 = vsel %vm338, %v958, 0.0
        %969 = vadd.xlane.f32.xlu0 %v968
        %v970 = vpop.xlane.xlu0 %969
        %v971 = vrcp.pop 33.0
        %v972 = vmul.f32 %v961, %v971
        %v973 = vmul.f32 %v964, %v971
        %v974 = vmul.f32 %v967, %v971
        %v975 = vmul.f32 %v970, %v971
        %v976 = vsub.f32 %v955, %v972
        %v977 = vsub.f32 %v956, %v973
        %v978 = vsub.f32 %v957, %v974
        %v979 = vsub.f32 %v958, %v975
        %v980 = vmul.f32 %v976, %v976
        %v981 = vmul.f32 %v977, %v977
        %v982 = vmul.f32 %v978, %v978
        %v983 = vmul.f32 %v979, %v979
        %v984 = vsel %vm338, %v980, 0.0
        %985 = vadd.xlane.f32.xlu0 %v984
        %v986 = vpop.xlane.xlu0 %985
        %v987 = vsel %vm338, %v981, 0.0
        %988 = vadd.xlane.f32.xlu0 %v987
        %v989 = vpop.xlane.xlu0 %988
        %v990 = vsel %vm338, %v982, 0.0
        %991 = vadd.xlane.f32.xlu0 %v990
        %v992 = vpop.xlane.xlu0 %991
        %v993 = vsel %vm338, %v983, 0.0
        %994 = vadd.xlane.f32.xlu0 %v993
        %v995 = vpop.xlane.xlu0 %994
        %v996 = vmul.f32 %v986, %v971
        %v997 = vmul.f32 %v989, %v971
        %v998 = vmul.f32 %v992, %v971
        %v999 = vmul.f32 %v995, %v971
        %v1000 = vadd.f32 %v996, 1e-05
        %v1001 = vadd.f32 %v997, 1e-05
        %v1002 = vadd.f32 %v998, 1e-05
        %v1003 = vadd.f32 %v999, 1e-05
        %v1004 = vrsqrt.pop %v1000
        %v1005 = vrsqrt.pop %v1001
        %v1006 = vrsqrt.pop %v1002
        %v1007 = vrsqrt.pop %v1003
        %v1008 = vmul.f32 %v976, %v1004
        %v1009 = vmul.f32 %v977, %v1005
        %v1010 = vmul.f32 %v978, %v1006
        %v1011 = vmul.f32 %v979, %v1007
        %v1012 = vlaneseq
        %v1013 = vshrl.u32 %v1012, 7
        %v1014 = vsub.s32 4, %v1013
        %v1015 = vrot.slane %v315, %v1014
        %v1016 = vmul.f32 %v1008, %v1015
        %v1017 = vmul.f32 %v1009, %v1015
        %v1018 = vmul.f32 %v1010, %v1015
        %v1019 = vmul.f32 %v1011, %v1015
        %v1020 = vlaneseq
        %v1021 = vshrl.u32 %v1020, 7
        %v1022 = vsub.s32 5, %v1021
        %v1023 = vrot.slane %v315, %v1022
        %v1024 = vadd.f32 %v1016, %v1023
        %v1025 = vadd.f32 %v1017, %v1023
        %v1026 = vadd.f32 %v1018, %v1023
        %v1027 = vadd.f32 %v1019, %v1023
        %v1028 = vpack.c.bf16 %v1025, %v1024
        %v1029 = vpack.c.bf16 %v1027, %v1026
        %v1030 = vlaneseq
        %v1031 = vshrl.u32 %v1030, 7
        %v1032 = vsub.s32 6, %v1031
        %v1033 = vrot.slane %v315, %v1032
        %v1039 = vunpack.c.l.b16 %v305
        %v1040 = vunpack.c.l.b16 %v306
        %v1041 = vunpack.c.l.b16 %v307
        %v1042 = vunpack.c.l.b16 %v308
        %v1043 = vunpack.c.l.b16 %v309
        %v1044 = vpack.c.b16 %v1040, %v1039
        %v1045 = vpack.c.b16 %v1042, %v1041
        %v1046 = vpack.c.b16 %v1043, %v1043
        %v1050 = vsel %vm338, %v1028, 0
        %v1053 = vsel %vm338, %v1029, 0
        %v1056 = vand.u32 %v1046, %v347
        %1058 = vmatprep.subr.bf16.mxu0 0
        %1059 = vmatpush1.bf16.msra.mxu0 0
        %1060 = vmatprep.subr.bf16.mxu0 0
        %1061 = vmatpush1.bf16.msra.mxu0 0
        %1062 = vmatprep.subr.bf16.mxu0 0
        %1063 = vmatpush1.bf16.msra.mxu0 0
        %1064 = vmatprep.subr.bf16.mxu0 0
        %1065 = vmatpush1.bf16.msra.mxu0 0
        %1066 = vmatprep.subr.bf16.mxu0 0
        %1067 = vmatpush1.bf16.msra.mxu0 0
        %1068 = vmatprep.subr.bf16.mxu0 0
        %1069 = vmatpush1.bf16.msra.mxu0 %v1056
        %1070 = vmatprep.subr.bf16.mxu0 0
        %1071 = vmatpush1.bf16.msra.mxu0 %v1045
        %1072 = vmatprep.subr.bf16.mxu0 0
        %1073 = vmatpush1.bf16.msra.mxu0 %v1044
        %1074 = vmatprep.subr.bf16.mxu0 0
        %1075 = vmatpush2.bf16.msra.mxu0 0
        %1076 = vmatprep.subr.bf16.mxu0 0
        %1077 = vmatpush2.bf16.msra.mxu0 0
        %1078 = vmatprep.subr.bf16.mxu0 0
        %1079 = vmatpush2.bf16.msra.mxu0 0
        %1080 = vmatprep.subr.bf16.mxu0 0
        %1081 = vmatpush2.bf16.msra.mxu0 0
        %1082 = vmatprep.subr.bf16.mxu0 0
        %1083 = vmatpush2.bf16.msra.mxu0 0
        %1084 = vmatprep.subr.bf16.mxu0 0
        %1085 = vmatpush2.bf16.msra.mxu0 0
        %1086 = vmatprep.subr.bf16.mxu0 0
        %1087 = vmatpush2.bf16.msra.mxu0 0
        %1088 = vmatprep.subr.bf16.mxu0 0
        %1089 = vmatpush2.bf16.msra.mxu0 0
        %1090 = vmatprep.mubr.bf16.mxu0 0
        %1091 = vmatmul.mubr.bf16.gmra.mxu0 %v1050
        %v1092 = vpop.f32.mrf.mxu0
        %v1093 = vadd.f32 %v1033, %v1092
        %v1094 = vpop.f32.mrf.mxu0
        %v1095 = vpop.f32.mrf.mxu0
        %v1096 = vadd.f32 %v1033, %v1095
        %v1097 = vpop.f32.mrf.mxu0
        %1098 = vmatprep.mubr.bf16.mxu0 0
        %1099 = vmatmul.mubr.bf16.gmra.mxu0 %v1053
        %v1100 = vpop.f32.mrf.mxu0
        %v1101 = vadd.f32 %v1033, %v1100
        %v1102 = vpop.f32.mrf.mxu0
        %v1103 = vpop.f32.mrf.mxu0
        %v1104 = vadd.f32 %v1033, %v1103
        %v1105 = vpop.f32.mrf.mxu0
        %1106 = vdwg.mxu0
        %v1107 = vmax.f32 %v1093, 0.0
        %v1108 = vmax.f32 %v1096, 0.0
        %v1109 = vmax.f32 %v1101, 0.0
        %v1110 = vmax.f32 %v1104, 0.0
        %v1111 = vpack.c.bf16 %v1108, %v1107
        %v1112 = vpack.c.bf16 %v1110, %v1109
        %v1113 = vlaneseq
        %v1114 = vshrl.u32 %v1113, 7
        %v1115 = vsub.s32 7, %v1114
        %v1116 = vrot.slane %v315, %v1115
        %v1122 = vunpack.c.l.b16 %v310
        %v1123 = vunpack.c.l.b16 %v311
        %v1124 = vunpack.c.l.b16 %v312
        %v1125 = vunpack.c.l.b16 %v313
        %v1126 = vunpack.c.l.b16 %v314
        %v1127 = vpack.c.b16 %v1123, %v1122
        %v1128 = vpack.c.b16 %v1125, %v1124
        %v1129 = vpack.c.b16 %v1126, %v1126
        %v1133 = vsel %vm338, %v1111, 0
        %v1136 = vsel %vm338, %v1112, 0
        %v1139 = vand.u32 %v1129, %v347
        %1141 = vmatprep.subr.bf16.mxu0 0
        %1142 = vmatpush1.bf16.msra.mxu0 0
        %1143 = vmatprep.subr.bf16.mxu0 0
        %1144 = vmatpush1.bf16.msra.mxu0 0
        %1145 = vmatprep.subr.bf16.mxu0 0
        %1146 = vmatpush1.bf16.msra.mxu0 0
        %1147 = vmatprep.subr.bf16.mxu0 0
        %1148 = vmatpush1.bf16.msra.mxu0 0
        %1149 = vmatprep.subr.bf16.mxu0 0
        %1150 = vmatpush1.bf16.msra.mxu0 0
        %1151 = vmatprep.subr.bf16.mxu0 0
        %1152 = vmatpush1.bf16.msra.mxu0 %v1139
        %1153 = vmatprep.subr.bf16.mxu0 0
        %1154 = vmatpush1.bf16.msra.mxu0 %v1128
        %1155 = vmatprep.subr.bf16.mxu0 0
        %1156 = vmatpush1.bf16.msra.mxu0 %v1127
        %1157 = vmatprep.subr.bf16.mxu0 0
        %1158 = vmatpush2.bf16.msra.mxu0 0
        %1159 = vmatprep.subr.bf16.mxu0 0
        %1160 = vmatpush2.bf16.msra.mxu0 0
        %1161 = vmatprep.subr.bf16.mxu0 0
        %1162 = vmatpush2.bf16.msra.mxu0 0
        %1163 = vmatprep.subr.bf16.mxu0 0
        %1164 = vmatpush2.bf16.msra.mxu0 0
        %1165 = vmatprep.subr.bf16.mxu0 0
        %1166 = vmatpush2.bf16.msra.mxu0 0
        %1167 = vmatprep.subr.bf16.mxu0 0
        %1168 = vmatpush2.bf16.msra.mxu0 0
        %1169 = vmatprep.subr.bf16.mxu0 0
        %1170 = vmatpush2.bf16.msra.mxu0 0
        %1171 = vmatprep.subr.bf16.mxu0 0
        %1172 = vmatpush2.bf16.msra.mxu0 0
        %1173 = vmatprep.mubr.bf16.mxu0 0
        %1174 = vmatmul.mubr.bf16.gmra.mxu0 %v1133
        %v1175 = vpop.f32.mrf.mxu0
        %v1176 = vadd.f32 %v1116, %v1175
        %v1177 = vpop.f32.mrf.mxu0
        %v1178 = vpop.f32.mrf.mxu0
        %v1179 = vadd.f32 %v1116, %v1178
        %v1180 = vpop.f32.mrf.mxu0
        %1181 = vmatprep.mubr.bf16.mxu0 0
        %1182 = vmatmul.mubr.bf16.gmra.mxu0 %v1136
        %v1183 = vpop.f32.mrf.mxu0
        %v1184 = vadd.f32 %v1116, %v1183
        %v1185 = vpop.f32.mrf.mxu0
        %v1186 = vpop.f32.mrf.mxu0
        %v1187 = vadd.f32 %v1116, %v1186
        %v1188 = vpop.f32.mrf.mxu0
        %1189 = vdwg.mxu0
        %v1190 = vadd.f32 %v1024, %v1176
        %v1191 = vadd.f32 %v1025, %v1179
        %v1192 = vadd.f32 %v1026, %v1184
        %v1193 = vadd.f32 %v1027, %v1187
        %v1194 = vsel %vm338, %v1190, 0.0
        %1195 = vadd.xlane.f32.xlu0 %v1194
        %v1196 = vpop.xlane.xlu0 %1195
        %v1197 = vsel %vm338, %v1191, 0.0
        %1198 = vadd.xlane.f32.xlu0 %v1197
        %v1199 = vpop.xlane.xlu0 %1198
        %v1200 = vsel %vm338, %v1192, 0.0
        %1201 = vadd.xlane.f32.xlu0 %v1200
        %v1202 = vpop.xlane.xlu0 %1201
        %v1203 = vsel %vm338, %v1193, 0.0
        %1204 = vadd.xlane.f32.xlu0 %v1203
        %v1205 = vpop.xlane.xlu0 %1204
        %v1206 = vmul.f32 %v1196, %v971
        %v1207 = vmul.f32 %v1199, %v971
        %v1208 = vmul.f32 %v1202, %v971
        %v1209 = vmul.f32 %v1205, %v971
        %v1210 = vsub.f32 %v1190, %v1206
        %v1211 = vsub.f32 %v1191, %v1207
        %v1212 = vsub.f32 %v1192, %v1208
        %v1213 = vsub.f32 %v1193, %v1209
        %v1214 = vmul.f32 %v1210, %v1210
        %v1215 = vmul.f32 %v1211, %v1211
        %v1216 = vmul.f32 %v1212, %v1212
        %v1217 = vmul.f32 %v1213, %v1213
        %v1218 = vsel %vm338, %v1214, 0.0
        %1219 = vadd.xlane.f32.xlu0 %v1218
        %v1220 = vpop.xlane.xlu0 %1219
        %v1221 = vsel %vm338, %v1215, 0.0
        %1222 = vadd.xlane.f32.xlu0 %v1221
        %v1223 = vpop.xlane.xlu0 %1222
        %v1224 = vsel %vm338, %v1216, 0.0
        %1225 = vadd.xlane.f32.xlu0 %v1224
        %v1226 = vpop.xlane.xlu0 %1225
        %v1227 = vsel %vm338, %v1217, 0.0
        %1228 = vadd.xlane.f32.xlu0 %v1227
        %v1229 = vpop.xlane.xlu0 %1228
        %v1230 = vmul.f32 %v1220, %v971
        %v1231 = vmul.f32 %v1223, %v971
        %v1232 = vmul.f32 %v1226, %v971
        %v1233 = vmul.f32 %v1229, %v971
        %v1234 = vadd.f32 %v1230, 1e-05
        %v1235 = vadd.f32 %v1231, 1e-05
        %v1236 = vadd.f32 %v1232, 1e-05
        %v1237 = vadd.f32 %v1233, 1e-05
        %v1238 = vrsqrt.pop %v1234
        %v1239 = vrsqrt.pop %v1235
        %v1240 = vrsqrt.pop %v1236
        %v1241 = vrsqrt.pop %v1237
        %v1242 = vmul.f32 %v1210, %v1238
        %v1243 = vmul.f32 %v1211, %v1239
        %v1244 = vmul.f32 %v1212, %v1240
        %v1245 = vmul.f32 %v1213, %v1241
        %v1246 = vlaneseq
        %v1247 = vshrl.u32 %v1246, 7
        %v1248 = vsub.s32 0, %v1247
        %v1249 = vrot.slane %v316, %v1248
        %v1250 = vmul.f32 %v1242, %v1249
        %v1251 = vmul.f32 %v1243, %v1249
        %v1252 = vmul.f32 %v1244, %v1249
        %v1253 = vmul.f32 %v1245, %v1249
        %v1254 = vlaneseq
        %v1255 = vshrl.u32 %v1254, 7
        %v1256 = vsub.s32 1, %v1255
        %v1257 = vrot.slane %v316, %v1256
        %v1258 = vadd.f32 %v1250, %v1257
        %v1259 = vadd.f32 %v1251, %v1257
        %v1260 = vadd.f32 %v1252, %v1257
        %v1261 = vadd.f32 %v1253, %v1257
        %1262 = vst.msk [vmem:[#allocation2] sm:$0xff] %vm338, %v1258
        %1263 = vst.msk [vmem:[#allocation2 + $0x8] sm:$0xff] %vm338, %v1259
        %1264 = vst.msk [vmem:[#allocation2 + $0x10] sm:$0xff] %vm338, %v1260
        %1265 = vst.msk [vmem:[#allocation2 + $0x18] sm:$0xff] %vm338, %v1261
        %p1266 = scmp.eq.s32.totalorder %s17, 1
        // Predicated region
        $region45: #{forward.1} parent=39 // pred_check
          %p1267 = pneg %p1266
        $region46: #{forward.1} parent=39 // pred_check_branch
          %1269 = sbr.rel (%p1267) target = $region48
        $region47: #{forward.1} parent=39 // pred_region
          %vm1270 = vcmask 269316
          %1271 = vst.msk [vmem:[#allocation3 - $0x4] sm:$0xf0] %vm1270, %v1261
        $region48: #{forward.1} parent=39 // pred_fallthru
          _
        // Predicated region
        $region49: #{forward.1} parent=39 // pred_check
          %p1272 = pneg %p145
        $region50: #{forward.1} parent=39 // pred_check_branch
          %1274 = sbr.rel (%p1272) target = $region52
        $region51: #{forward.1} parent=39 // pred_region
          %s1276 = ssub.s32 64, 64
          %1277 = vsyncadd [#allocation4], %s1276
          %s1279 = sshll.u32 [#allocation3], 4
          %s1280 = int_to_ptr.vmem [resolvable:$true] %s1279
          %1282 = dma.vmem_to_hbm [thread:$0]  %s1280, 64, %s5, [#allocation4]
        $region52: #{forward.1} parent=39 // pred_fallthru
          _
        // Predicated region
        $region53: #{forward.1} parent=39 // pred_check
          %p1283 = pneg %p145
        $region54: #{forward.1} parent=39 // pred_check_branch
          %1285 = sbr.rel (%p1283) target = $region56
        $region55: #{forward.1} parent=39 // pred_region
          %1286 = dma.done [#allocation4], 64
        $region56: #{forward.1} parent=39 // pred_fallthru
          _
      $region40: #{forward.1} parent=5 // pred_fallthru
        _
      %p1287 = scmp.le.s32.totalorder 2, %s12
      // Predicated region
      $region57: #{forward.1} parent=5 // pred_check
        %p1288 = pneg %p1287
      $region58: #{forward.1} parent=5 // pred_check_branch
        %1290 = sbr.rel (%p1288) target = $region60
      $region59: #{forward.1} parent=5 // pred_region
        %s1291 = ssub.s32 %s12, 2
      $region60: #{forward.1} parent=5 // pred_fallthru
        _
    $region6: #{forward.1} parent=1 // loop_footer
      %s16 = sadd.s32 1, %s12
    $region7: #{forward.1} parent=1 // loop_footer_branch
      %11 = sbr.rel target = $region3
    $region8: #{forward.1} parent=1 // loop_exit
      _
    %1292 = vsyncpa [#allocation4], 1
    %s1293 = scalar_lea.sflag [#allocation4], 1
    %1294 = vsyncpa %s1293, 1

</llo_original>
